<compile_context>
chip_gen: v7x
topology: tpu7x:2x2x1
jax: 0.10.0
libtpu: 0.0.40
codegen_flags: <defaults>
</compile_context>

<pallas_src>
import jax
import jax.numpy as jnp
import numpy as np
from jax.experimental import pallas as pl
from jax.experimental.pallas import tpu as pltpu


def _intent_kernel(x_ref, v_ref, len_ref, w_ref, b_ref, rep_ref, pred_ref):
    tb, t, h = x_ref.shape
    xf = x_ref[...].astype(jnp.float32)            # (TB, T, H) f32 (no-op for f32 input)
    v = v_ref[...].reshape(1, 1, h)                # (1, 1, H) f32 — H stays on lanes
    lens = len_ref[...]                            # (TB, 1, 1) int32

    # ---- logits in the native (T=sublane, H=lane) layout: VPU mul + lane reduce
    logits = jnp.sum(xf * v, axis=-1, keepdims=True)            # (TB, T, 1) f32

    # ---- masked, per-row-stabilized softmax over timesteps (all (TB, T, 1)) --
    row_max = jnp.max(logits, axis=1, keepdims=True)            # (TB, 1, 1)
    unnorm = jnp.exp(logits - row_max)                          # EUP
    idx = jax.lax.broadcasted_iota(jnp.int32, (t, 1), 0)[None]  # (1, T, 1) sublane iota
    mask = (idx < lens).astype(jnp.float32)                     # (TB, T, 1)
    masked = unnorm * mask
    att_sums = jnp.sum(masked, axis=1, keepdims=True)           # (TB, 1, 1)
    att_sums = jnp.maximum(att_sums, 1e-30)                     # zero-length guard
    attn = masked * pl.reciprocal(att_sums, approx=False)       # (TB, T, 1) f32

    # ---- representation: VPU weighted sum over T (data already in vregs) ----
    rep = jnp.sum(xf * attn, axis=1)                            # (TB, H) f32

    # ---- fused intent classifier: rep @ W_pad + b (only MXU op in the kernel)
    # HIGHEST kept so f32 accuracy meets the 1e-4/1e-5 test tolerance; on v5e
    # HIGH/DEFAULT is cheaper but the tolerance must be relaxed together.
    pred = jnp.dot(
        rep, w_ref[...],
        precision=jax.lax.Precision.HIGHEST,
        preferred_element_type=jnp.float32,
    ) + b_ref[...]                                              # (TB, N_pad)

    rep_ref[...] = rep.astype(rep_ref.dtype)
    pred_ref[...] = pred.astype(pred_ref.dtype)


def _vmem_defaults():
    """Generation-aware (tiling budget, vmem_limit) in bytes."""
    cap = None
    try:
        cap = pltpu.get_tpu_info().vmem_capacity_bytes
    except Exception:
        cap = None
    if cap is None or cap < 100 * 1024 * 1024:
        # v7x: 64 MiB per TensorCore — keep headroom.
        return 20 * 1024 * 1024, 32 * 1024 * 1024
    # v5e / v6e: 128 MiB physical VMEM — bigger tiles amortize per-step cost.
    return 48 * 1024 * 1024, 96 * 1024 * 1024


def _pick_block_b(B, T, H, n_pad, x_itemsize, budget_bytes):
    """Largest batch tile (multiple of 8) whose working set (double-buffered
    blocks + in-kernel f32 temporaries) fits the VMEM budget, capped so the
    grid has >= 2 steps when B > 8 (v7x megacore + prefetch overlap)."""
    const_bytes = 2 * 4 * (H + H * n_pad + n_pad)       # v, W, b (dbl-buffered)
    per_row = (2 * T * H * x_itemsize                   # x tile (dbl-buffered)
               + T * H * 4                              # f32 working copy / product
               + 8 * T * 4                              # logits/unnorm/mask/attn chain
               + 2 * 4 * (H + n_pad)                    # rep/pred out blocks (dbl)
               + 4 * (H + n_pad)                        # rep/pred f32 temporaries
               + 2 * 4)                                 # lengths
    tb = (budget_bytes - const_bytes) // max(per_row, 1)
    tb = int(min(tb, B))
    if tb >= 8:
        tb -= tb % 8                 # keep sublane alignment of output blocks
    else:
        tb = B                       # tiny batches: single whole-batch block
    if B > 8:
        cap = -(-B // 2)             # ceil(B / 2)  -> at least 2 grid steps
        cap -= cap % 8
        cap = max(cap, 8)
        tb = min(tb, cap)
    return max(1, tb)


def intent_predictor_forward(inputs, input_lengths, attention_vector,
                             linear_w, linear_b, *, block_b=None,
                             vmem_budget_bytes=None, vmem_limit_bytes=None):
    """inputs: (B, T, H) (f32 or bf16); input_lengths: (B,) int;
    attention_vector: (H,); linear_w: (num_intent, H) torch layout;
    linear_b: (num_intent,).  Returns (prediction (B, num_intent), rep (B, H))."""
    B, T, H = inputs.shape
    N = linear_w.shape[0]
    n_pad = max(128, ((N + 127) // 128) * 128)   # lane-dense classifier output

    # One-time tiny padding/transpose of the classifier params so the kernel's
    # prediction block is a dense multiple of 128 lanes (unmasked stores).
    w_pad = jnp.zeros((H, n_pad), jnp.float32).at[:, :N].set(
        linear_w.astype(jnp.float32).T)
    b_pad = jnp.zeros((1, n_pad), jnp.float32).at[:, :N].set(
        linear_b.astype(jnp.float32)[None, :])
    v_row = attention_vector.astype(jnp.float32).reshape(1, H)
    lens3d = input_lengths.astype(jnp.int32).reshape(B, 1, 1)

    budget, limit = _vmem_defaults()
    if vmem_budget_bytes is not None:
        budget = vmem_budget_bytes
    if vmem_limit_bytes is not None:
        limit = vmem_limit_bytes

    if block_b is None:
        block_b = _pick_block_b(B, T, H, n_pad, inputs.dtype.itemsize, budget)
    bp = ((B + block_b - 1) // block_b) * block_b
    if bp != B:                                   # pad batch to a whole tile
        inputs = jnp.pad(inputs, ((0, bp - B), (0, 0), (0, 0)))
        lens3d = jnp.pad(lens3d, ((0, bp - B), (0, 0), (0, 0)), constant_values=1)

    rep, pred = pl.pallas_call(
        _intent_kernel,
        out_shape=(
            jax.ShapeDtypeStruct((bp, H), jnp.float32),
            jax.ShapeDtypeStruct((bp, n_pad), jnp.float32),
        ),
        grid=(bp // block_b,),
        in_specs=[
            pl.BlockSpec((block_b, T, H), lambda i: (i, 0, 0)),   # x tile (native dtype)
            pl.BlockSpec((1, H), lambda i: (0, 0)),               # attention vector
            pl.BlockSpec((block_b, 1, 1), lambda i: (i, 0, 0)),   # lengths
            pl.BlockSpec((H, n_pad), lambda i: (0, 0)),           # classifier W (padded)
            pl.BlockSpec((1, n_pad), lambda i: (0, 0)),           # classifier b (padded)
        ],
        out_specs=(
            pl.BlockSpec((block_b, H), lambda i: (i, 0)),         # representations
            pl.BlockSpec((block_b, n_pad), lambda i: (i, 0)),     # predictions
        ),
        compiler_params=pltpu.CompilerParams(
            dimension_semantics=("parallel",),   # shard batch grid across TCs (v7x)
            vmem_limit_bytes=limit,
        ),
    )(inputs, v_row, lens3d, w_pad, b_pad)

    return pred[:B, :N], rep[:B]


def _reference_numpy(inputs, lengths, v, w, b):
    """float64 NumPy reference mirroring the PyTorch forward (global max)."""
    x = np.asarray(inputs, dtype=np.float64)
    v = np.asarray(v, dtype=np.float64)
    w = np.asarray(w, dtype=np.float64)
    b = np.asarray(b, dtype=np.float64)
    lengths = np.asarray(lengths)
    logits = x @ v                                            # (B, T)
    unnorm = np.exp(logits - logits.max())                    # global max (torch)
    T = x.shape[1]
    mask = (np.arange(T)[None, :] < lengths[:, None]).astype(np.float64)
    masked = unnorm * mask
    att = masked / masked.sum(axis=1, keepdims=True)
    rep = np.einsum('bt,bth->bh', att, x)
    pred = rep @ w.T + b
    return rep, pred


if __name__ == "__main__":
    # IntentPredictor shapes: bidirectional LSTM, hidden_dim=64 -> attention_size=128
    B, T, H, N_INTENT = 16, 16, 128, 7
    key = jax.random.PRNGKey(0)
    k_x, k_v, k_w, k_b, k_len = jax.random.split(key, 5)

    inputs = jax.random.normal(k_x, (B, T, H), dtype=jnp.float32)
    # Attention parameter init: uniform(-0.01, 0.01), matching torch.nn.init.uniform
    attention_vector = jax.random.uniform(
        k_v, (H,), dtype=jnp.float32, minval=-0.01, maxval=0.01)
    bound = 1.0 / np.sqrt(H)
    linear_w = jax.random.uniform(
        k_w, (N_INTENT, H), dtype=jnp.float32, minval=-bound, maxval=bound)
    linear_b = jax.random.uniform(
        k_b, (N_INTENT,), dtype=jnp.float32, minval=-bound, maxval=bound)
    input_lengths = jax.random.randint(k_len, (B,), 1, T + 1, dtype=jnp.int32)

    # block_b=None -> generation-aware auto pick; for B=16 this yields
    # block_b=8, grid=(2,), exercising the batch-tiled, pipelined path.
    pred, rep = intent_predictor_forward(
        inputs, input_lengths, attention_vector, linear_w, linear_b)
    pred = jax.block_until_ready(pred)
    rep = jax.block_until_ready(rep)

    rep_ref, pred_ref = _reference_numpy(
        inputs, input_lengths, attention_vector, linear_w, linear_b)
    np.testing.assert_allclose(np.asarray(rep), rep_ref, rtol=1e-4, atol=1e-5)
    np.testing.assert_allclose(np.asarray(pred), pred_ref, rtol=1e-4, atol=1e-5)

    print("KERNEL_OK")
</pallas_src>

<mosaic_0001>
module attributes {stable_mosaic.version = 11 : i64} {
  func.func @_intent_kernel(%arg0: i32, %arg1: memref<8x16x128xf32, #tpu.memory_space<vmem>>, %arg2: memref<1x128xf32, #tpu.memory_space<vmem>>, %arg3: memref<8x1x1xi32, #tpu.memory_space<vmem>>, %arg4: memref<128x128xf32, #tpu.memory_space<vmem>>, %arg5: memref<1x128xf32, #tpu.memory_space<vmem>>, %arg6: memref<8x128xf32, #tpu.memory_space<vmem>>, %arg7: memref<8x128xf32, #tpu.memory_space<vmem>>) attributes {dimension_semantics = [#tpu.dimension_semantics<parallel>], iteration_bounds = array<i64: 2>, scalar_prefetch = 0 : i64, scratch_operands = 0 : i64, tpu.core_type = #tpu.core_type<tc>, window_params = [{transform_indices = @transform_0, window_bounds = array<i64: 8, 16, 128>}, {pipeline_mode = #tpu.pipeline_mode<synchronous>, transform_indices = @transform_1, window_bounds = array<i64: 1, 128>}, {transform_indices = @transform_2, window_bounds = array<i64: 8, 1, 1>}, {pipeline_mode = #tpu.pipeline_mode<synchronous>, transform_indices = @transform_3, window_bounds = array<i64: 128, 128>}, {pipeline_mode = #tpu.pipeline_mode<synchronous>, transform_indices = @transform_4, window_bounds = array<i64: 1, 128>}, {transform_indices = @transform_5, window_bounds = array<i64: 8, 128>}, {transform_indices = @transform_6, window_bounds = array<i64: 8, 128>}]} {
    %c0 = arith.constant 0 : index
    %c0_0 = arith.constant 0 : index
    %c0_1 = arith.constant 0 : index
    %0 = vector.load %arg1[%c0, %c0_0, %c0_1] : memref<8x16x128xf32, #tpu.memory_space<vmem>>, vector<8x16x128xf32>
    %c0_2 = arith.constant 0 : index
    %c0_3 = arith.constant 0 : index
    %1 = vector.load %arg2[%c0_2, %c0_3] : memref<1x128xf32, #tpu.memory_space<vmem>>, vector<1x128xf32>
    %2 = vector.shape_cast %1 : vector<1x128xf32> to vector<1x1x128xf32>
    %c0_4 = arith.constant 0 : index
    %c0_5 = arith.constant 0 : index
    %c0_6 = arith.constant 0 : index
    %3 = vector.load %arg3[%c0_4, %c0_5, %c0_6] : memref<8x1x1xi32, #tpu.memory_space<vmem>>, vector<8x1x1xi32>
    %4 = vector.broadcast %2 : vector<1x1x128xf32> to vector<8x16x128xf32>
    %5 = arith.mulf %0, %4 : vector<8x16x128xf32>
    %cst = arith.constant dense<0.000000e+00> : vector<8x16xf32>
    %6 = vector.multi_reduction <add>, %5, %cst [2] : vector<8x16x128xf32> to vector<8x16xf32>
    %7 = vector.shape_cast %6 : vector<8x16xf32> to vector<8x16x1xf32>
    %cst_7 = arith.constant dense<0xFF800000> : vector<8x1xf32>
    %8 = vector.multi_reduction <maximumf>, %7, %cst_7 [1] : vector<8x16x1xf32> to vector<8x1xf32>
    %9 = vector.shape_cast %8 : vector<8x1xf32> to vector<8x1x1xf32>
    %10 = vector.broadcast %9 : vector<8x1x1xf32> to vector<8x16x1xf32>
    %11 = arith.subf %7, %10 : vector<8x16x1xf32>
    %12 = math.exp %11 : vector<8x16x1xf32>
    %13 = tpu.iota {dimensions = array<i32: 0>} : vector<16x1xi32>
    %14 = vector.shape_cast %13 : vector<16x1xi32> to vector<1x16x1xi32>
    %15 = vector.broadcast %14 : vector<1x16x1xi32> to vector<8x16x1xi32>
    %16 = vector.broadcast %3 : vector<8x1x1xi32> to vector<8x16x1xi32>
    %17 = arith.cmpi slt, %15, %16 : vector<8x16x1xi32>
    %18 = arith.extui %17 : vector<8x16x1xi1> to vector<8x16x1xi32>
    %19 = arith.sitofp %18 : vector<8x16x1xi32> to vector<8x16x1xf32>
    %20 = arith.mulf %12, %19 : vector<8x16x1xf32>
    %cst_8 = arith.constant dense<0.000000e+00> : vector<8x1xf32>
    %21 = vector.multi_reduction <add>, %20, %cst_8 [1] : vector<8x16x1xf32> to vector<8x1xf32>
    %22 = vector.shape_cast %21 : vector<8x1xf32> to vector<8x1x1xf32>
    %cst_9 = arith.constant 1.000000e-30 : f32
    %23 = vector.broadcast %cst_9 : f32 to vector<8x1x1xf32>
    %24 = arith.maximumf %22, %23 : vector<8x1x1xf32>
    %25 = tpu.reciprocal %24 : vector<8x1x1xf32> -> vector<8x1x1xf32>
    %26 = vector.broadcast %25 : vector<8x1x1xf32> to vector<8x16x1xf32>
    %27 = arith.mulf %20, %26 : vector<8x16x1xf32>
    %28 = vector.broadcast %27 : vector<8x16x1xf32> to vector<8x16x128xf32>
    %29 = arith.mulf %0, %28 : vector<8x16x128xf32>
    %cst_10 = arith.constant dense<0.000000e+00> : vector<8x128xf32>
    %30 = vector.multi_reduction <add>, %29, %cst_10 [1] : vector<8x16x128xf32> to vector<8x128xf32>
    %c0_11 = arith.constant 0 : index
    %c0_12 = arith.constant 0 : index
    %31 = vector.load %arg4[%c0_11, %c0_12] : memref<128x128xf32, #tpu.memory_space<vmem>>, vector<128x128xf32>
    %cst_13 = arith.constant dense<0.000000e+00> : vector<8x128xf32>
    %32 = tpu.matmul %30, %31, %cst_13 {dimension_numbers = #tpu.dot_dimension_numbers<[1], [0], [0], [1], [0, 0, 1, 1], [], []>, precision = #tpu.contract_precision<fp32>} : vector<8x128xf32>, vector<128x128xf32>, vector<8x128xf32> -> vector<8x128xf32>
    %c0_14 = arith.constant 0 : index
    %c0_15 = arith.constant 0 : index
    %33 = vector.load %arg5[%c0_14, %c0_15] : memref<1x128xf32, #tpu.memory_space<vmem>>, vector<1x128xf32>
    %34 = vector.broadcast %33 : vector<1x128xf32> to vector<8x128xf32>
    %35 = arith.addf %32, %34 : vector<8x128xf32>
    %c0_16 = arith.constant 0 : index
    %c0_17 = arith.constant 0 : index
    %36 = vector.load %arg6[%c0_16, %c0_17] : memref<8x128xf32, #tpu.memory_space<vmem>>, vector<8x128xf32>
    tpu.vector_store %arg6[%c0_16, %c0_17], %30 {strides = array<i32>} : memref<8x128xf32, #tpu.memory_space<vmem>>, vector<8x128xf32>,
    %c0_18 = arith.constant 0 : index
    %c0_19 = arith.constant 0 : index
    %37 = vector.load %arg7[%c0_18, %c0_19] : memref<8x128xf32, #tpu.memory_space<vmem>>, vector<8x128xf32>
    tpu.vector_store %arg7[%c0_18, %c0_19], %35 {strides = array<i32>} : memref<8x128xf32, #tpu.memory_space<vmem>>, vector<8x128xf32>,
    return
  }
  func.func @transform_0(%arg0: i32) -> (i32, i32, i32) {
    %c0_i32 = arith.constant 0 : i32
    %c0_i32_0 = arith.constant 0 : i32
    %c0_i32_1 = arith.constant 0 : i32
    return %arg0, %c0_i32, %c0_i32_0 : i32, i32, i32
  }
  func.func @transform_1(%arg0: i32) -> (i32, i32) {
    %c0_i32 = arith.constant 0 : i32
    %c0_i32_0 = arith.constant 0 : i32
    %c0_i32_1 = arith.constant 0 : i32
    return %c0_i32, %c0_i32_0 : i32, i32
  }
  func.func @transform_2(%arg0: i32) -> (i32, i32, i32) {
    %c0_i32 = arith.constant 0 : i32
    %c0_i32_0 = arith.constant 0 : i32
    %c0_i32_1 = arith.constant 0 : i32
    return %arg0, %c0_i32, %c0_i32_0 : i32, i32, i32
  }
  func.func @transform_3(%arg0: i32) -> (i32, i32) {
    %c0_i32 = arith.constant 0 : i32
    %c0_i32_0 = arith.constant 0 : i32
    %c0_i32_1 = arith.constant 0 : i32
    return %c0_i32, %c0_i32_0 : i32, i32
  }
  func.func @transform_4(%arg0: i32) -> (i32, i32) {
    %c0_i32 = arith.constant 0 : i32
    %c0_i32_0 = arith.constant 0 : i32
    %c0_i32_1 = arith.constant 0 : i32
    return %c0_i32, %c0_i32_0 : i32, i32
  }
  func.func @transform_5(%arg0: i32) -> (i32, i32) {
    %c0_i32 = arith.constant 0 : i32
    %c0_i32_0 = arith.constant 0 : i32
    return %arg0, %c0_i32 : i32, i32
  }
  func.func @transform_6(%arg0: i32) -> (i32, i32) {
    %c0_i32 = arith.constant 0 : i32
    %c0_i32_0 = arith.constant 0 : i32
    return %arg0, %c0_i32 : i32, i32
  }
}

</mosaic_0001>

<llo_original>
// kernel: tpu_custom_call.1
$region0: #{tpu_custom_call.1}
  #allocation0 [shape = 'u32[]', space=smem, size = 0x4, offset = 0x4, fixed_abs, tag = 'smem constant byte address 0x4 - core index']
  #allocation1 [shape = 'u32[144,128]{1,0:T(1,128)}', space=vmem, size = 0x12000, scoped, tag = 'internal scratch']
  %s0 = inlined_call_operand.hbm [shape: f32[16,16,128], index: 0, kind: input, shape index: {}]
  %s1 = inlined_call_operand.vmem [shape: f32[1,128], index: 1, kind: input, shape index: {}]
  %s2 = inlined_call_operand.vmem [shape: s32[16,1,1], index: 2, kind: input, shape index: {}]
  %s3 = inlined_call_operand.hbm [shape: f32[128,128], index: 3, kind: input, shape index: {}]
  %s4 = inlined_call_operand.vmem [shape: f32[1,128], index: 4, kind: input, shape index: {}]
  %s5 = inlined_call_operand.hbm [shape: f32[16,128], index: 5, kind: output, shape index: {0}]
  %s6 = inlined_call_operand.hbm [shape: f32[16,128], index: 6, kind: output, shape index: {1}]
  %7 = xla_tuple %s5, %s6
  %s8 = sld [smem:[#allocation0]]
  $region69: #{tpu_custom_call.1} parent=0
    _
  %s10 = ssub.s32 1, %s8
  %s11 = scalar_select 0, %s10, %s8
  $region1: #{tpu_custom_call.1} parent=0
    #allocation2 [shape = 'u8[131072]{0}', space=vmem, size = 0x20000, scoped, tag = 'input window, operand 0']
    #allocation3 [shape = 's32[2]{0}', space=sflag, size = 0x8, scoped, tag = 'scoped memory for tpu_custom_call.1']
    #allocation4 [shape = 's32[2]{0}', space=sflag, size = 0x8, scoped, tag = 'scoped memory for tpu_custom_call.1']
    #allocation5 [shape = 'u8[65536]{0}', space=vmem, size = 0x10000, scoped, tag = 'input window, operand 3, single buffered']
    #allocation6 [shape = 's32[1]{0}', space=sflag, size = 0x4, scoped, tag = 'scoped memory for tpu_custom_call.1']
    #allocation7 [shape = 'u8[8192]{0}', space=vmem, size = 0x2000, scoped, tag = 'output window, operand 0']
    #allocation8 [shape = 'u8[8192]{0}', space=vmem, size = 0x2000, scoped, tag = 'output window, operand 1']
    #allocation9 [shape = 's32[2]{0}', space=sflag, size = 0x8, scoped, tag = 'scoped memory for tpu_custom_call.1']
    %12 = vsyncpa [#allocation3], 0
    %s13 = scalar_lea.sflag [#allocation3], 1
    %14 = vsyncpa %s13, 0
    %15 = vsyncpa [#allocation6], 0
    %16 = vsyncpa [#allocation4], 0
    %s17 = scalar_lea.sflag [#allocation4], 1
    %18 = vsyncpa %s17, 0
    %19 = vsyncpa [#allocation9], 0
    %s20 = scalar_lea.sflag [#allocation9], 1
    %21 = vsyncpa %s20, 0
    loop: start=0, step=1, limit=4
    $region2: #{tpu_custom_call.1} parent=1 // loop_pre_header
      _
    $region3: #{tpu_custom_call.1} parent=1 // loop_header
      %s23 = sphi 0, %s27
      %p24 = scmp.ge.s32.totalorder %s23, 4
      %s33 = sphi 0, %s35
      %s36 = sphi 0, %s33
      %s37 = sphi 0, %s36
      %s53 = sphi 0, %s37
      %s57 = sphi 0, %s57
      %s59 = sphi 0, %s57
      %s60 = sphi 0, %s59
      %s74 = sphi 0, %s60
      %s80 = sphi 0, %s82
      %s83 = sphi 0, %s80
      %s84 = sphi 0, %s83
      %s100 = sphi 0, %s84
      %s104 = sphi 0, %s104
      %s106 = sphi 0, %s104
      %s107 = sphi 0, %s106
      %s121 = sphi 0, %s107
      %s125 = sphi 0, %s125
      %s127 = sphi 0, %s125
      %s128 = sphi 0, %s127
      %s142 = sphi 0, %s128
      %s148 = sphi 0, %s150
      %s151 = sphi 0, %s148
      %s152 = sphi 0, %s151
      %s168 = sphi 0, %s152
      %s174 = sphi 0, %s176
      %s177 = sphi 0, %s174
      %s178 = sphi 0, %s177
      %s194 = sphi 0, %s178
    $region4: #{tpu_custom_call.1} parent=1 // loop_header_branch
      %26 = sbr.rel (%p24) target = $region8
    $region5: #{tpu_custom_call.1} parent=1 // loop_body
      %s28 = ssub.s32 %s23, 1
      %s29 = ssub.s32 %s23, 2
      %s30 = sadd.s32 %s23, 1
      %s31 = ssub.s32 %s23, %s30
      %p32 = scmp.eq.s32.totalorder %s31, 0
      %s34 = sadd.s32 %s33, 1
      %s35 = scalar_select %p32, %s33, %s34
      %p38 = pneg %p32
      %p39 = scmp.eq.s32.totalorder %s23, 1
      %p40 = por %p38, %p39
      %p41 = scmp.ne.s32.totalorder %s33, %s36
      %p42 = scmp.eq.s32.totalorder %s23, 0
      %p43 = por %p41, %p42
      %p44 = scmp.ne.s32.totalorder %s33, %s36
      %p45 = scmp.eq.s32.totalorder %s28, 1
      %p46 = por %p44, %p45
      %p47 = scmp.ne.s32.totalorder %s36, %s37
      %p48 = scmp.eq.s32.totalorder %s28, 0
      %p49 = por %p47, %p48
      %p50 = scmp.ne.s32.totalorder %s36, %s37
      %p51 = scmp.eq.s32.totalorder %s29, 1
      %p52 = por %p50, %p51
      %p54 = scmp.ne.s32.totalorder %s37, %s53
      %p55 = scmp.eq.s32.totalorder %s29, 0
      %p56 = por %p54, %p55
      %s58 = sadd.s32 %s57, 1
      %p61 = scmp.eq.s32.totalorder %s23, 1
      %p62 = scmp.ne.s32.totalorder %s57, %s59
      %p63 = scmp.eq.s32.totalorder %s23, 0
      %p64 = por %p62, %p63
      %p65 = scmp.ne.s32.totalorder %s57, %s59
      %p66 = scmp.eq.s32.totalorder %s28, 1
      %p67 = por %p65, %p66
      %p68 = scmp.ne.s32.totalorder %s59, %s60
      %p69 = scmp.eq.s32.totalorder %s28, 0
      %p70 = por %p68, %p69
      %p71 = scmp.ne.s32.totalorder %s59, %s60
      %p72 = scmp.eq.s32.totalorder %s29, 1
      %p73 = por %p71, %p72
      %p75 = scmp.ne.s32.totalorder %s60, %s74
      %p76 = scmp.eq.s32.totalorder %s29, 0
      %p77 = por %p75, %p76
      %s78 = ssub.s32 %s23, %s30
      %p79 = scmp.eq.s32.totalorder %s78, 0
      %s81 = sadd.s32 %s80, 1
      %s82 = scalar_select %p79, %s80, %s81
      %p85 = pneg %p79
      %p86 = scmp.eq.s32.totalorder %s23, 1
      %p87 = por %p85, %p86
      %p88 = scmp.ne.s32.totalorder %s80, %s83
      %p89 = scmp.eq.s32.totalorder %s23, 0
      %p90 = por %p88, %p89
      %p91 = scmp.ne.s32.totalorder %s80, %s83
      %p92 = scmp.eq.s32.totalorder %s28, 1
      %p93 = por %p91, %p92
      %p94 = scmp.ne.s32.totalorder %s83, %s84
      %p95 = scmp.eq.s32.totalorder %s28, 0
      %p96 = por %p94, %p95
      %p97 = scmp.ne.s32.totalorder %s83, %s84
      %p98 = scmp.eq.s32.totalorder %s29, 1
      %p99 = por %p97, %p98
      %p101 = scmp.ne.s32.totalorder %s84, %s100
      %p102 = scmp.eq.s32.totalorder %s29, 0
      %p103 = por %p101, %p102
      %s105 = sadd.s32 %s104, 1
      %p108 = scmp.eq.s32.totalorder %s23, 1
      %p109 = scmp.ne.s32.totalorder %s104, %s106
      %p110 = scmp.eq.s32.totalorder %s23, 0
      %p111 = por %p109, %p110
      %p112 = scmp.ne.s32.totalorder %s104, %s106
      %p113 = scmp.eq.s32.totalorder %s28, 1
      %p114 = por %p112, %p113
      %p115 = scmp.ne.s32.totalorder %s106, %s107
      %p116 = scmp.eq.s32.totalorder %s28, 0
      %p117 = por %p115, %p116
      %p118 = scmp.ne.s32.totalorder %s106, %s107
      %p119 = scmp.eq.s32.totalorder %s29, 1
      %p120 = por %p118, %p119
      %p122 = scmp.ne.s32.totalorder %s107, %s121
      %p123 = scmp.eq.s32.totalorder %s29, 0
      %p124 = por %p122, %p123
      %s126 = sadd.s32 %s125, 1
      %p129 = scmp.eq.s32.totalorder %s23, 1
      %p130 = scmp.ne.s32.totalorder %s125, %s127
      %p131 = scmp.eq.s32.totalorder %s23, 0
      %p132 = por %p130, %p131
      %p133 = scmp.ne.s32.totalorder %s125, %s127
      %p134 = scmp.eq.s32.totalorder %s28, 1
      %p135 = por %p133, %p134
      %p136 = scmp.ne.s32.totalorder %s127, %s128
      %p137 = scmp.eq.s32.totalorder %s28, 0
      %p138 = por %p136, %p137
      %p139 = scmp.ne.s32.totalorder %s127, %s128
      %p140 = scmp.eq.s32.totalorder %s29, 1
      %p141 = por %p139, %p140
      %p143 = scmp.ne.s32.totalorder %s128, %s142
      %p144 = scmp.eq.s32.totalorder %s29, 0
      %p145 = por %p143, %p144
      %s146 = ssub.s32 %s23, %s30
      %p147 = scmp.eq.s32.totalorder %s146, 0
      %s149 = sadd.s32 %s148, 1
      %s150 = scalar_select %p147, %s148, %s149
      %p153 = pneg %p147
      %p154 = scmp.eq.s32.totalorder %s23, 1
      %p155 = por %p153, %p154
      %p156 = scmp.ne.s32.totalorder %s148, %s151
      %p157 = scmp.eq.s32.totalorder %s23, 0
      %p158 = por %p156, %p157
      %p159 = scmp.ne.s32.totalorder %s148, %s151
      %p160 = scmp.eq.s32.totalorder %s28, 1
      %p161 = por %p159, %p160
      %p162 = scmp.ne.s32.totalorder %s151, %s152
      %p163 = scmp.eq.s32.totalorder %s28, 0
      %p164 = por %p162, %p163
      %p165 = scmp.ne.s32.totalorder %s151, %s152
      %p166 = scmp.eq.s32.totalorder %s29, 1
      %p167 = por %p165, %p166
      %p169 = scmp.ne.s32.totalorder %s152, %s168
      %p170 = scmp.eq.s32.totalorder %s29, 0
      %p171 = por %p169, %p170
      %s172 = ssub.s32 %s23, %s30
      %p173 = scmp.eq.s32.totalorder %s172, 0
      %s175 = sadd.s32 %s174, 1
      %s176 = scalar_select %p173, %s174, %s175
      %p179 = pneg %p173
      %p180 = scmp.eq.s32.totalorder %s23, 1
      %p181 = por %p179, %p180
      %p182 = scmp.ne.s32.totalorder %s174, %s177
      %p183 = scmp.eq.s32.totalorder %s23, 0
      %p184 = por %p182, %p183
      %p185 = scmp.ne.s32.totalorder %s174, %s177
      %p186 = scmp.eq.s32.totalorder %s28, 1
      %p187 = por %p185, %p186
      %p188 = scmp.ne.s32.totalorder %s177, %s178
      %p189 = scmp.eq.s32.totalorder %s28, 0
      %p190 = por %p188, %p189
      %p191 = scmp.ne.s32.totalorder %s177, %s178
      %p192 = scmp.eq.s32.totalorder %s29, 1
      %p193 = por %p191, %p192
      %p195 = scmp.ne.s32.totalorder %s178, %s194
      %p196 = scmp.eq.s32.totalorder %s29, 0
      %p197 = por %p195, %p196
      %p198 = scmp.le.s32.totalorder 1, %s23
      %p199 = scmp.lt.s32.totalorder %s23, 3
      %p200 = pnand %p198, %p199
      %p201 = pneg %p200
      // Predicated region
      $region9: #{tpu_custom_call.1} parent=5 // pred_check
        _
      $region10: #{tpu_custom_call.1} parent=5 // pred_check_branch
        %203 = sbr.rel (%p200) target = $region12
      $region11: #{tpu_custom_call.1} parent=5 // pred_region
        %s204 = ssub.s32 %s23, 1
        // Predicated region
        $region13: #{tpu_custom_call.1} parent=11 // pred_check
          %p205 = pneg %p70
        $region14: #{tpu_custom_call.1} parent=11 // pred_check_branch
          %207 = sbr.rel (%p205) target = $region16
        $region15: #{tpu_custom_call.1} parent=11 // pred_region
          _
        $region16: #{tpu_custom_call.1} parent=11 // pred_fallthru
          _
        // Predicated region
        $region17: #{tpu_custom_call.1} parent=11 // pred_check
          %p208 = pneg %p117
        $region18: #{tpu_custom_call.1} parent=11 // pred_check_branch
          %210 = sbr.rel (%p208) target = $region20
        $region19: #{tpu_custom_call.1} parent=11 // pred_region
          %s212 = ssub.s32 2048, 2048
          %213 = vsyncadd [#allocation6], %s212
          %s214 = sshll.u32 [#allocation5], 4
          %s215 = int_to_ptr.vmem [resolvable:$true] %s214
          %220 = dma.hbm_to_vmem [thread:$0]  %s3, 2048, %s215, [#allocation6], 128, 128, 8
        $region20: #{tpu_custom_call.1} parent=11 // pred_fallthru
          _
        // Predicated region
        $region21: #{tpu_custom_call.1} parent=11 // pred_check
          %p221 = pneg %p138
        $region22: #{tpu_custom_call.1} parent=11 // pred_check_branch
          %223 = sbr.rel (%p221) target = $region24
        $region23: #{tpu_custom_call.1} parent=11 // pred_region
          _
        $region24: #{tpu_custom_call.1} parent=11 // pred_fallthru
          _
      $region12: #{tpu_custom_call.1} parent=5 // pred_fallthru
        _
      %p224 = scmp.lt.s32.totalorder %s23, 2
      // Predicated region
      $region25: #{tpu_custom_call.1} parent=5 // pred_check
        %p225 = pneg %p224
      $region26: #{tpu_custom_call.1} parent=5 // pred_check_branch
        %227 = sbr.rel (%p225) target = $region28
      $region27: #{tpu_custom_call.1} parent=5 // pred_region
        // Predicated region
        $region29: #{tpu_custom_call.1} parent=27 // pred_check
          %p228 = pneg %p43
        $region30: #{tpu_custom_call.1} parent=27 // pred_check_branch
          %230 = sbr.rel (%p228) target = $region32
        $region31: #{tpu_custom_call.1} parent=27 // pred_region
          %s231 = sand.u32 %s33, 1
          %s232 = scalar_lea.sflag [#allocation3], %s231
          %s233 = sand.u32 %s33, 1
          %s234 = smul.addr %s233, 128
          %s235 = scalar_lea.vmem [#allocation2], %s234
          %s236 = smul.u32 8, %s23
          %s238 = ssub.s32 2048, 2048
          %239 = vsyncadd %s232, %s238
          %s240 = smul.addr %s236, 2
          %s241 = smul.addr %s240, 128
          %s242 = scalar_lea.hbm %s0, %s241
          %s243 = sshll.u32 %s235, 4
          %s244 = int_to_ptr.vmem [resolvable:$true] %s243
          %249 = dma.hbm_to_vmem [thread:$0]  %s242, 2048, %s244, %s232, 128, 128, 8
        $region32: #{tpu_custom_call.1} parent=27 // pred_fallthru
          _
        // Predicated region
        $region33: #{tpu_custom_call.1} parent=27 // pred_check
          %p250 = pneg %p90
        $region34: #{tpu_custom_call.1} parent=27 // pred_check_branch
          %252 = sbr.rel (%p250) target = $region36
        $region35: #{tpu_custom_call.1} parent=27 // pred_region
          %s253 = smul.u32 8, %s23
          %p254 = scmp.lt.s32.totalorder %s253, 15
          %s255 = scalar_select %p254, %s253, 15
          %s256 = scalar_lea.vmem %s2, %s255
          %s257 = smul.u32 8, %s23
        $region36: #{tpu_custom_call.1} parent=27 // pred_fallthru
          _
      $region28: #{tpu_custom_call.1} parent=5 // pred_fallthru
        _
      %p258 = scmp.le.s32.totalorder 1, %s23
      %p259 = scmp.lt.s32.totalorder %s23, 3
      %p260 = pnand %p258, %p259
      %p261 = pneg %p260
      // Predicated region
      $region37: #{tpu_custom_call.1} parent=5 // pred_check
        _
      $region38: #{tpu_custom_call.1} parent=5 // pred_check_branch
        %263 = sbr.rel (%p260) target = $region40
      $region39: #{tpu_custom_call.1} parent=5 // pred_region
        %s264 = ssub.s32 %s23, 1
        %s265 = sand.u32 %s36, 1
        %s266 = scalar_lea.sflag [#allocation3], %s265
        %s267 = sand.u32 %s36, 1
        %s268 = smul.addr %s267, 128
        %s269 = scalar_lea.vmem [#allocation2], %s268
        // Predicated region
        $region41: #{tpu_custom_call.1} parent=39 // pred_check
          %p270 = pneg %p49
        $region42: #{tpu_custom_call.1} parent=39 // pred_check_branch
          %272 = sbr.rel (%p270) target = $region44
        $region43: #{tpu_custom_call.1} parent=39 // pred_region
          %273 = dma.done %s266, 2048
        $region44: #{tpu_custom_call.1} parent=39 // pred_fallthru
          _
        // Predicated region
        $region45: #{tpu_custom_call.1} parent=39 // pred_check
          %p274 = pneg %p117
        $region46: #{tpu_custom_call.1} parent=39 // pred_check_branch
          %276 = sbr.rel (%p274) target = $region48
        $region47: #{tpu_custom_call.1} parent=39 // pred_region
          %277 = dma.done [#allocation6], 2048
        $region48: #{tpu_custom_call.1} parent=39 // pred_fallthru
          _
        %s278 = sand.u32 %s36, 1
        %s279 = scalar_lea.sflag [#allocation3], %s278
        %s280 = sand.u32 %s36, 1
        %s281 = smul.addr %s280, 128
        %s282 = scalar_lea.vmem [#allocation2], %s281
        %p283 = pneg %p49
        %p284 = pneg %p46
        %p285 = pneg %p70
        %p286 = pneg %p67
        %s287 = smul.u32 8, %s28
        %p288 = scmp.lt.s32.totalorder %s287, 15
        %s289 = scalar_select %p288, %s287, 15
        %s290 = scalar_lea.vmem %s2, %s289
        %p291 = pneg %p96
        %p292 = pneg %p93
        %p293 = pneg %p117
        %p294 = pneg %p114
        %p295 = pneg %p138
        %p296 = pneg %p135
        %p297 = pneg %p164
        %p298 = pneg %p161
        %s299 = sand.u32 %s151, 1
        %s300 = scalar_lea.sflag [#allocation4], %s299
        %s301 = sand.u32 %s151, 1
        %s302 = smul.addr %s301, 8
        %s303 = scalar_lea.vmem [#allocation7], %s302
        %p304 = pneg %p190
        %p305 = pneg %p187
        %s306 = sand.u32 %s177, 1
        %s307 = scalar_lea.sflag [#allocation9], %s306
        %s308 = sand.u32 %s177, 1
        %s309 = smul.addr %s308, 8
        %s310 = scalar_lea.vmem [#allocation8], %s309
        %s311 = smul.u32 8, %s28
        %s312 = smul.u32 8, %s28
        %p313 = scmp.lt.s32.totalorder %s312, 15
        %s314 = scalar_select %p313, %s312, 15
        %s315 = scalar_lea.vmem %s2, %s314
        %s316 = smul.u32 8, %s28
        %v317 = vld [vmem:[%s269] sm:$0xff]
        %v318 = vld [vmem:[%s269 + $0x8] sm:$0xff]
        %v319 = vld [vmem:[%s269 + $0x10] sm:$0xff]
        %v320 = vld [vmem:[%s269 + $0x18] sm:$0xff]
        %v321 = vld [vmem:[%s269 + $0x20] sm:$0xff]
        %v322 = vld [vmem:[%s269 + $0x28] sm:$0xff]
        %v323 = vld [vmem:[%s269 + $0x30] sm:$0xff]
        %v324 = vld [vmem:[%s269 + $0x38] sm:$0xff]
        %v325 = vld [vmem:[%s269 + $0x40] sm:$0xff]
        %v326 = vld [vmem:[%s269 + $0x48] sm:$0xff]
        %v327 = vld [vmem:[%s269 + $0x50] sm:$0xff]
        %v328 = vld [vmem:[%s269 + $0x58] sm:$0xff]
        %v329 = vld [vmem:[%s269 + $0x60] sm:$0xff]
        %v330 = vld [vmem:[%s269 + $0x68] sm:$0xff]
        %v331 = vld [vmem:[%s269 + $0x70] sm:$0xff]
        %v332 = vld [vmem:[%s269 + $0x78] sm:$0xff]
        %v333 = vld [vmem:[%s1] sm:$0x1]
        %v334 = vld [vmem:[%s315] sm:$0x1]
        %v335 = vld [vmem:[%s315 + $0x1] sm:$0x1]
        %v336 = vld [vmem:[%s315 + $0x2] sm:$0x1]
        %v337 = vld [vmem:[%s315 + $0x3] sm:$0x1]
        %v338 = vld [vmem:[%s315 + $0x4] sm:$0x1]
        %v339 = vld [vmem:[%s315 + $0x5] sm:$0x1]
        %v340 = vld [vmem:[%s315 + $0x6] sm:$0x1]
        %v341 = vld [vmem:[%s315 + $0x7] sm:$0x1]
        %v343 = vlaneseq
        %v344 = vshrl.u32 %v343, 7
        %v345 = vsub.s32 0, %v344
        %v346 = vrot.slane %v333, %v345
        %v348 = vmul.f32 %v317, %v346
        %v349 = vmul.f32 %v318, %v346
        %v350 = vmul.f32 %v319, %v346
        %v351 = vmul.f32 %v320, %v346
        %v352 = vmul.f32 %v321, %v346
        %v353 = vmul.f32 %v322, %v346
        %v354 = vmul.f32 %v323, %v346
        %v355 = vmul.f32 %v324, %v346
        %v356 = vmul.f32 %v325, %v346
        %v357 = vmul.f32 %v326, %v346
        %v358 = vmul.f32 %v327, %v346
        %v359 = vmul.f32 %v328, %v346
        %v360 = vmul.f32 %v329, %v346
        %v361 = vmul.f32 %v330, %v346
        %v362 = vmul.f32 %v331, %v346
        %v363 = vmul.f32 %v332, %v346
        %364 = vadd.xlane.f32.xlu0 %v348
        %v365 = vpop.xlane.xlu0 %364
        %366 = vadd.xlane.f32.xlu0 %v349
        %v367 = vpop.xlane.xlu0 %366
        %368 = vadd.xlane.f32.xlu0 %v350
        %v369 = vpop.xlane.xlu0 %368
        %370 = vadd.xlane.f32.xlu0 %v351
        %v371 = vpop.xlane.xlu0 %370
        %372 = vadd.xlane.f32.xlu0 %v352
        %v373 = vpop.xlane.xlu0 %372
        %374 = vadd.xlane.f32.xlu0 %v353
        %v375 = vpop.xlane.xlu0 %374
        %376 = vadd.xlane.f32.xlu0 %v354
        %v377 = vpop.xlane.xlu0 %376
        %378 = vadd.xlane.f32.xlu0 %v355
        %v379 = vpop.xlane.xlu0 %378
        %380 = vadd.xlane.f32.xlu0 %v356
        %v381 = vpop.xlane.xlu0 %380
        %382 = vadd.xlane.f32.xlu0 %v357
        %v383 = vpop.xlane.xlu0 %382
        %384 = vadd.xlane.f32.xlu0 %v358
        %v385 = vpop.xlane.xlu0 %384
        %386 = vadd.xlane.f32.xlu0 %v359
        %v387 = vpop.xlane.xlu0 %386
        %388 = vadd.xlane.f32.xlu0 %v360
        %v389 = vpop.xlane.xlu0 %388
        %390 = vadd.xlane.f32.xlu0 %v361
        %v391 = vpop.xlane.xlu0 %390
        %392 = vadd.xlane.f32.xlu0 %v362
        %v393 = vpop.xlane.xlu0 %392
        %394 = vadd.xlane.f32.xlu0 %v363
        %v395 = vpop.xlane.xlu0 %394
        %v396 = vmax.f32 %v365, %v367
        %v397 = vrot.slane %v396, 4
        %v398 = vmax.f32 %v396, %v397
        %v399 = vrot.slane %v398, 2
        %v400 = vmax.f32 %v398, %v399
        %v401 = vrot.slane %v400, 1
        %v402 = vmax.f32 %v400, %v401
        %v403 = vmax.f32 %v369, %v371
        %v404 = vrot.slane %v403, 4
        %v405 = vmax.f32 %v403, %v404
        %v406 = vrot.slane %v405, 2
        %v407 = vmax.f32 %v405, %v406
        %v408 = vrot.slane %v407, 1
        %v409 = vmax.f32 %v407, %v408
        %v410 = vmax.f32 %v373, %v375
        %v411 = vrot.slane %v410, 4
        %v412 = vmax.f32 %v410, %v411
        %v413 = vrot.slane %v412, 2
        %v414 = vmax.f32 %v412, %v413
        %v415 = vrot.slane %v414, 1
        %v416 = vmax.f32 %v414, %v415
        %v417 = vmax.f32 %v377, %v379
        %v418 = vrot.slane %v417, 4
        %v419 = vmax.f32 %v417, %v418
        %v420 = vrot.slane %v419, 2
        %v421 = vmax.f32 %v419, %v420
        %v422 = vrot.slane %v421, 1
        %v423 = vmax.f32 %v421, %v422
        %v424 = vmax.f32 %v381, %v383
        %v425 = vrot.slane %v424, 4
        %v426 = vmax.f32 %v424, %v425
        %v427 = vrot.slane %v426, 2
        %v428 = vmax.f32 %v426, %v427
        %v429 = vrot.slane %v428, 1
        %v430 = vmax.f32 %v428, %v429
        %v431 = vmax.f32 %v385, %v387
        %v432 = vrot.slane %v431, 4
        %v433 = vmax.f32 %v431, %v432
        %v434 = vrot.slane %v433, 2
        %v435 = vmax.f32 %v433, %v434
        %v436 = vrot.slane %v435, 1
        %v437 = vmax.f32 %v435, %v436
        %v438 = vmax.f32 %v389, %v391
        %v439 = vrot.slane %v438, 4
        %v440 = vmax.f32 %v438, %v439
        %v441 = vrot.slane %v440, 2
        %v442 = vmax.f32 %v440, %v441
        %v443 = vrot.slane %v442, 1
        %v444 = vmax.f32 %v442, %v443
        %v445 = vmax.f32 %v393, %v395
        %v446 = vrot.slane %v445, 4
        %v447 = vmax.f32 %v445, %v446
        %v448 = vrot.slane %v447, 2
        %v449 = vmax.f32 %v447, %v448
        %v450 = vrot.slane %v449, 1
        %v451 = vmax.f32 %v449, %v450
        %v452 = vsub.f32 %v365, %v402
        %v453 = vsub.f32 %v367, %v402
        %v454 = vsub.f32 %v369, %v409
        %v455 = vsub.f32 %v371, %v409
        %v456 = vsub.f32 %v373, %v416
        %v457 = vsub.f32 %v375, %v416
        %v458 = vsub.f32 %v377, %v423
        %v459 = vsub.f32 %v379, %v423
        %v460 = vsub.f32 %v381, %v430
        %v461 = vsub.f32 %v383, %v430
        %v462 = vsub.f32 %v385, %v437
        %v463 = vsub.f32 %v387, %v437
        %v464 = vsub.f32 %v389, %v444
        %v465 = vsub.f32 %v391, %v444
        %v466 = vsub.f32 %v393, %v451
        %v467 = vsub.f32 %v395, %v451
        %v468 = vmul.f32 %v452, 1.442695
        %v469 = vpow.pop %v468
        %v470 = vmul.f32 %v453, 1.442695
        %v471 = vpow.pop %v470
        %v472 = vmul.f32 %v454, 1.442695
        %v473 = vpow.pop %v472
        %v474 = vmul.f32 %v455, 1.442695
        %v475 = vpow.pop %v474
        %v476 = vmul.f32 %v456, 1.442695
        %v477 = vpow.pop %v476
        %v478 = vmul.f32 %v457, 1.442695
        %v479 = vpow.pop %v478
        %v480 = vmul.f32 %v458, 1.442695
        %v481 = vpow.pop %v480
        %v482 = vmul.f32 %v459, 1.442695
        %v483 = vpow.pop %v482
        %v484 = vmul.f32 %v460, 1.442695
        %v485 = vpow.pop %v484
        %v486 = vmul.f32 %v461, 1.442695
        %v487 = vpow.pop %v486
        %v488 = vmul.f32 %v462, 1.442695
        %v489 = vpow.pop %v488
        %v490 = vmul.f32 %v463, 1.442695
        %v491 = vpow.pop %v490
        %v492 = vmul.f32 %v464, 1.442695
        %v493 = vpow.pop %v492
        %v494 = vmul.f32 %v465, 1.442695
        %v495 = vpow.pop %v494
        %v496 = vmul.f32 %v466, 1.442695
        %v497 = vpow.pop %v496
        %v498 = vmul.f32 %v467, 1.442695
        %v499 = vpow.pop %v498
        %v500 = vlaneseq
        %v501 = vshrl.u32 %v500, 7
        %v502 = vadd.s32 %v501, 8
        %v503 = vlaneseq
        %v504 = vshrl.u32 %v503, 7
        %v505 = vsub.s32 0, %v504
        %v506 = vrot.slane %v334, %v505
        %v507 = vlaneseq
        %v508 = vshrl.u32 %v507, 7
        %v509 = vsub.s32 0, %v508
        %v510 = vrot.slane %v335, %v509
        %v511 = vlaneseq
        %v512 = vshrl.u32 %v511, 7
        %v513 = vsub.s32 0, %v512
        %v514 = vrot.slane %v336, %v513
        %v515 = vlaneseq
        %v516 = vshrl.u32 %v515, 7
        %v517 = vsub.s32 0, %v516
        %v518 = vrot.slane %v337, %v517
        %v519 = vlaneseq
        %v520 = vshrl.u32 %v519, 7
        %v521 = vsub.s32 0, %v520
        %v522 = vrot.slane %v338, %v521
        %v523 = vlaneseq
        %v524 = vshrl.u32 %v523, 7
        %v525 = vsub.s32 0, %v524
        %v526 = vrot.slane %v339, %v525
        %v527 = vlaneseq
        %v528 = vshrl.u32 %v527, 7
        %v529 = vsub.s32 0, %v528
        %v530 = vrot.slane %v340, %v529
        %v531 = vlaneseq
        %v532 = vshrl.u32 %v531, 7
        %v533 = vsub.s32 0, %v532
        %v534 = vrot.slane %v341, %v533
        %vm535 = vcmp.lt.s32.totalorder %v501, %v506
        %vm536 = vcmp.lt.s32.totalorder %v502, %v506
        %vm537 = vcmp.lt.s32.totalorder %v501, %v510
        %vm538 = vcmp.lt.s32.totalorder %v502, %v510
        %vm539 = vcmp.lt.s32.totalorder %v501, %v514
        %vm540 = vcmp.lt.s32.totalorder %v502, %v514
        %vm541 = vcmp.lt.s32.totalorder %v501, %v518
        %vm542 = vcmp.lt.s32.totalorder %v502, %v518
        %vm543 = vcmp.lt.s32.totalorder %v501, %v522
        %vm544 = vcmp.lt.s32.totalorder %v502, %v522
        %vm545 = vcmp.lt.s32.totalorder %v501, %v526
        %vm546 = vcmp.lt.s32.totalorder %v502, %v526
        %vm547 = vcmp.lt.s32.totalorder %v501, %v530
        %vm548 = vcmp.lt.s32.totalorder %v502, %v530
        %vm549 = vcmp.lt.s32.totalorder %v501, %v534
        %vm550 = vcmp.lt.s32.totalorder %v502, %v534
        %v551 = vsel %vm535, 1, 0
        %v552 = vsel %vm536, 1, 0
        %v553 = vsel %vm537, 1, 0
        %v554 = vsel %vm538, 1, 0
        %v555 = vsel %vm539, 1, 0
        %v556 = vsel %vm540, 1, 0
        %v557 = vsel %vm541, 1, 0
        %v558 = vsel %vm542, 1, 0
        %v559 = vsel %vm543, 1, 0
        %v560 = vsel %vm544, 1, 0
        %v561 = vsel %vm545, 1, 0
        %v562 = vsel %vm546, 1, 0
        %v563 = vsel %vm547, 1, 0
        %v564 = vsel %vm548, 1, 0
        %v565 = vsel %vm549, 1, 0
        %v566 = vsel %vm550, 1, 0
        %v567 = vcvt.s32.f32 %v551
        %v568 = vcvt.s32.f32 %v552
        %v569 = vcvt.s32.f32 %v553
        %v570 = vcvt.s32.f32 %v554
        %v571 = vcvt.s32.f32 %v555
        %v572 = vcvt.s32.f32 %v556
        %v573 = vcvt.s32.f32 %v557
        %v574 = vcvt.s32.f32 %v558
        %v575 = vcvt.s32.f32 %v559
        %v576 = vcvt.s32.f32 %v560
        %v577 = vcvt.s32.f32 %v561
        %v578 = vcvt.s32.f32 %v562
        %v579 = vcvt.s32.f32 %v563
        %v580 = vcvt.s32.f32 %v564
        %v581 = vcvt.s32.f32 %v565
        %v582 = vcvt.s32.f32 %v566
        %v583 = vmul.f32 %v469, %v567
        %v584 = vmul.f32 %v471, %v568
        %v585 = vmul.f32 %v473, %v569
        %v586 = vmul.f32 %v475, %v570
        %v587 = vmul.f32 %v477, %v571
        %v588 = vmul.f32 %v479, %v572
        %v589 = vmul.f32 %v481, %v573
        %v590 = vmul.f32 %v483, %v574
        %v591 = vmul.f32 %v485, %v575
        %v592 = vmul.f32 %v487, %v576
        %v593 = vmul.f32 %v489, %v577
        %v594 = vmul.f32 %v491, %v578
        %v595 = vmul.f32 %v493, %v579
        %v596 = vmul.f32 %v495, %v580
        %v597 = vmul.f32 %v497, %v581
        %v598 = vmul.f32 %v499, %v582
        %vm599 = vcmask 7168
        %v600 = vsel %vm599, %v583, 0.0
        %v601 = vsel %vm599, %v584, 0.0
        %v602 = vadd.f32 %v600, %v601
        %v603 = vrot.slane %v602, 4
        %v604 = vadd.f32 %v602, %v603
        %v605 = vrot.slane %v604, 2
        %v606 = vadd.f32 %v604, %v605
        %v607 = vrot.slane %v606, 1
        %v608 = vadd.f32 %v606, %v607
        %v609 = vsel %vm599, %v585, 0.0
        %v610 = vsel %vm599, %v586, 0.0
        %v611 = vadd.f32 %v609, %v610
        %v612 = vrot.slane %v611, 4
        %v613 = vadd.f32 %v611, %v612
        %v614 = vrot.slane %v613, 2
        %v615 = vadd.f32 %v613, %v614
        %v616 = vrot.slane %v615, 1
        %v617 = vadd.f32 %v615, %v616
        %v618 = vsel %vm599, %v587, 0.0
        %v619 = vsel %vm599, %v588, 0.0
        %v620 = vadd.f32 %v618, %v619
        %v621 = vrot.slane %v620, 4
        %v622 = vadd.f32 %v620, %v621
        %v623 = vrot.slane %v622, 2
        %v624 = vadd.f32 %v622, %v623
        %v625 = vrot.slane %v624, 1
        %v626 = vadd.f32 %v624, %v625
        %v627 = vsel %vm599, %v589, 0.0
        %v628 = vsel %vm599, %v590, 0.0
        %v629 = vadd.f32 %v627, %v628
        %v630 = vrot.slane %v629, 4
        %v631 = vadd.f32 %v629, %v630
        %v632 = vrot.slane %v631, 2
        %v633 = vadd.f32 %v631, %v632
        %v634 = vrot.slane %v633, 1
        %v635 = vadd.f32 %v633, %v634
        %v636 = vsel %vm599, %v591, 0.0
        %v637 = vsel %vm599, %v592, 0.0
        %v638 = vadd.f32 %v636, %v637
        %v639 = vrot.slane %v638, 4
        %v640 = vadd.f32 %v638, %v639
        %v641 = vrot.slane %v640, 2
        %v642 = vadd.f32 %v640, %v641
        %v643 = vrot.slane %v642, 1
        %v644 = vadd.f32 %v642, %v643
        %v645 = vsel %vm599, %v593, 0.0
        %v646 = vsel %vm599, %v594, 0.0
        %v647 = vadd.f32 %v645, %v646
        %v648 = vrot.slane %v647, 4
        %v649 = vadd.f32 %v647, %v648
        %v650 = vrot.slane %v649, 2
        %v651 = vadd.f32 %v649, %v650
        %v652 = vrot.slane %v651, 1
        %v653 = vadd.f32 %v651, %v652
        %v654 = vsel %vm599, %v595, 0.0
        %v655 = vsel %vm599, %v596, 0.0
        %v656 = vadd.f32 %v654, %v655
        %v657 = vrot.slane %v656, 4
        %v658 = vadd.f32 %v656, %v657
        %v659 = vrot.slane %v658, 2
        %v660 = vadd.f32 %v658, %v659
        %v661 = vrot.slane %v660, 1
        %v662 = vadd.f32 %v660, %v661
        %v663 = vsel %vm599, %v597, 0.0
        %v664 = vsel %vm599, %v598, 0.0
        %v665 = vadd.f32 %v663, %v664
        %v666 = vrot.slane %v665, 4
        %v667 = vadd.f32 %v665, %v666
        %v668 = vrot.slane %v667, 2
        %v669 = vadd.f32 %v667, %v668
        %v670 = vrot.slane %v669, 1
        %v671 = vadd.f32 %v669, %v670
        %v672 = vmax.f32 %v608, 1e-30
        %v673 = vmax.f32 %v617, 1e-30
        %v674 = vmax.f32 %v626, 1e-30
        %v675 = vmax.f32 %v635, 1e-30
        %v676 = vmax.f32 %v644, 1e-30
        %v677 = vmax.f32 %v653, 1e-30
        %v678 = vmax.f32 %v662, 1e-30
        %v679 = vmax.f32 %v671, 1e-30
        %v680 = vrcp.pop %v672
        %v681 = vrcp.pop %v673
        %v682 = vrcp.pop %v674
        %v683 = vrcp.pop %v675
        %v684 = vrcp.pop %v676
        %v685 = vrcp.pop %v677
        %v686 = vrcp.pop %v678
        %v687 = vrcp.pop %v679
        %v688 = vmul.f32 %v583, %v680
        %v689 = vmul.f32 %v584, %v680
        %v690 = vmul.f32 %v585, %v681
        %v691 = vmul.f32 %v586, %v681
        %v692 = vmul.f32 %v587, %v682
        %v693 = vmul.f32 %v588, %v682
        %v694 = vmul.f32 %v589, %v683
        %v695 = vmul.f32 %v590, %v683
        %v696 = vmul.f32 %v591, %v684
        %v697 = vmul.f32 %v592, %v684
        %v698 = vmul.f32 %v593, %v685
        %v699 = vmul.f32 %v594, %v685
        %v700 = vmul.f32 %v595, %v686
        %v701 = vmul.f32 %v596, %v686
        %v702 = vmul.f32 %v597, %v687
        %v703 = vmul.f32 %v598, %v687
        %705 = vset.pattern.permute.xlu0 0
        %706 = vperm.xlu0 %705, %v688
        %v707 = vpop.permute.xlu0 %706
        %710 = vset.pattern.permute.xlu0 0
        %711 = vperm.xlu0 %710, %v689
        %v712 = vpop.permute.xlu0 %711
        %715 = vset.pattern.permute.xlu0 0
        %716 = vperm.xlu0 %715, %v690
        %v717 = vpop.permute.xlu0 %716
        %720 = vset.pattern.permute.xlu0 0
        %721 = vperm.xlu0 %720, %v691
        %v722 = vpop.permute.xlu0 %721
        %725 = vset.pattern.permute.xlu0 0
        %726 = vperm.xlu0 %725, %v692
        %v727 = vpop.permute.xlu0 %726
        %730 = vset.pattern.permute.xlu0 0
        %731 = vperm.xlu0 %730, %v693
        %v732 = vpop.permute.xlu0 %731
        %735 = vset.pattern.permute.xlu0 0
        %736 = vperm.xlu0 %735, %v694
        %v737 = vpop.permute.xlu0 %736
        %740 = vset.pattern.permute.xlu0 0
        %741 = vperm.xlu0 %740, %v695
        %v742 = vpop.permute.xlu0 %741
        %745 = vset.pattern.permute.xlu0 0
        %746 = vperm.xlu0 %745, %v696
        %v747 = vpop.permute.xlu0 %746
        %750 = vset.pattern.permute.xlu0 0
        %751 = vperm.xlu0 %750, %v697
        %v752 = vpop.permute.xlu0 %751
        %755 = vset.pattern.permute.xlu0 0
        %756 = vperm.xlu0 %755, %v698
        %v757 = vpop.permute.xlu0 %756
        %760 = vset.pattern.permute.xlu0 0
        %761 = vperm.xlu0 %760, %v699
        %v762 = vpop.permute.xlu0 %761
        %765 = vset.pattern.permute.xlu0 0
        %766 = vperm.xlu0 %765, %v700
        %v767 = vpop.permute.xlu0 %766
        %770 = vset.pattern.permute.xlu0 0
        %771 = vperm.xlu0 %770, %v701
        %v772 = vpop.permute.xlu0 %771
        %775 = vset.pattern.permute.xlu0 0
        %776 = vperm.xlu0 %775, %v702
        %v777 = vpop.permute.xlu0 %776
        %780 = vset.pattern.permute.xlu0 0
        %781 = vperm.xlu0 %780, %v703
        %v782 = vpop.permute.xlu0 %781
        %v784 = vmul.f32 %v317, %v707
        %v785 = vmul.f32 %v318, %v712
        %v786 = vmul.f32 %v319, %v717
        %v787 = vmul.f32 %v320, %v722
        %v788 = vmul.f32 %v321, %v727
        %v789 = vmul.f32 %v322, %v732
        %v790 = vmul.f32 %v323, %v737
        %v791 = vmul.f32 %v324, %v742
        %v792 = vmul.f32 %v325, %v747
        %v793 = vmul.f32 %v326, %v752
        %v794 = vmul.f32 %v327, %v757
        %v795 = vmul.f32 %v328, %v762
        %v796 = vmul.f32 %v329, %v767
        %v797 = vmul.f32 %v330, %v772
        %v798 = vmul.f32 %v331, %v777
        %v799 = vmul.f32 %v332, %v782
        %v800 = vadd.f32 %v784, %v785
        %v801 = vrot.slane %v800, 4
        %v802 = vadd.f32 %v800, %v801
        %v803 = vrot.slane %v802, 2
        %v804 = vadd.f32 %v802, %v803
        %v805 = vrot.slane %v804, 1
        %v806 = vadd.f32 %v804, %v805
        %v807 = vadd.f32 %v786, %v787
        %v808 = vrot.slane %v807, 4
        %v809 = vadd.f32 %v807, %v808
        %v810 = vrot.slane %v809, 2
        %v811 = vadd.f32 %v809, %v810
        %v812 = vrot.slane %v811, 1
        %v813 = vadd.f32 %v811, %v812
        %v814 = vadd.f32 %v788, %v789
        %v815 = vrot.slane %v814, 4
        %v816 = vadd.f32 %v814, %v815
        %v817 = vrot.slane %v816, 2
        %v818 = vadd.f32 %v816, %v817
        %v819 = vrot.slane %v818, 1
        %v820 = vadd.f32 %v818, %v819
        %v821 = vadd.f32 %v790, %v791
        %v822 = vrot.slane %v821, 4
        %v823 = vadd.f32 %v821, %v822
        %v824 = vrot.slane %v823, 2
        %v825 = vadd.f32 %v823, %v824
        %v826 = vrot.slane %v825, 1
        %v827 = vadd.f32 %v825, %v826
        %v828 = vadd.f32 %v792, %v793
        %v829 = vrot.slane %v828, 4
        %v830 = vadd.f32 %v828, %v829
        %v831 = vrot.slane %v830, 2
        %v832 = vadd.f32 %v830, %v831
        %v833 = vrot.slane %v832, 1
        %v834 = vadd.f32 %v832, %v833
        %v835 = vadd.f32 %v794, %v795
        %v836 = vrot.slane %v835, 4
        %v837 = vadd.f32 %v835, %v836
        %v838 = vrot.slane %v837, 2
        %v839 = vadd.f32 %v837, %v838
        %v840 = vrot.slane %v839, 1
        %v841 = vadd.f32 %v839, %v840
        %v842 = vadd.f32 %v796, %v797
        %v843 = vrot.slane %v842, 4
        %v844 = vadd.f32 %v842, %v843
        %v845 = vrot.slane %v844, 2
        %v846 = vadd.f32 %v844, %v845
        %v847 = vrot.slane %v846, 1
        %v848 = vadd.f32 %v846, %v847
        %v849 = vadd.f32 %v798, %v799
        %v850 = vrot.slane %v849, 4
        %v851 = vadd.f32 %v849, %v850
        %v852 = vrot.slane %v851, 2
        %v853 = vadd.f32 %v851, %v852
        %v854 = vrot.slane %v853, 1
        %v855 = vadd.f32 %v853, %v854
        %v856 = vld [vmem:[#allocation5] sm:$0xff]
        %v857 = vld [vmem:[#allocation5 + $0x8] sm:$0xff]
        %v858 = vld [vmem:[#allocation5 + $0x10] sm:$0xff]
        %v859 = vld [vmem:[#allocation5 + $0x18] sm:$0xff]
        %v860 = vld [vmem:[#allocation5 + $0x20] sm:$0xff]
        %v861 = vld [vmem:[#allocation5 + $0x28] sm:$0xff]
        %v862 = vld [vmem:[#allocation5 + $0x30] sm:$0xff]
        %v863 = vld [vmem:[#allocation5 + $0x38] sm:$0xff]
        %v864 = vld [vmem:[#allocation5 + $0x40] sm:$0xff]
        %v865 = vld [vmem:[#allocation5 + $0x48] sm:$0xff]
        %v866 = vld [vmem:[#allocation5 + $0x50] sm:$0xff]
        %v867 = vld [vmem:[#allocation5 + $0x58] sm:$0xff]
        %v868 = vld [vmem:[#allocation5 + $0x60] sm:$0xff]
        %v869 = vld [vmem:[#allocation5 + $0x68] sm:$0xff]
        %v870 = vld [vmem:[#allocation5 + $0x70] sm:$0xff]
        %v871 = vld [vmem:[#allocation5 + $0x78] sm:$0xff]
        %v872 = vld [vmem:[%s4] sm:$0x1]
        %v874 = vlaneseq
        %v875 = vshrl.u32 %v874, 7
        %v876 = vsub.s32 0, %v875
        %v877 = vrot.slane %v872, %v876
        %vm887 = vcmask 1041409
        %v888 = vsel %vm887, %v813, %v806
        %vm889 = vcmask 1042434
        %v890 = vsel %vm889, %v820, %v888
        %vm891 = vcmask 1043459
        %v892 = vsel %vm891, %v827, %v890
        %vm893 = vcmask 1044484
        %v894 = vsel %vm893, %v834, %v892
        %vm895 = vcmask 1045509
        %v896 = vsel %vm895, %v841, %v894
        %vm897 = vcmask 1046534
        %v898 = vsel %vm897, %v848, %v896
        %vm899 = vcmask 1047559
        %v900 = vsel %vm899, %v855, %v898
        %902 = vmatprep.subr.mxu0 0.0
        %v903 = vand.u32 %v856, 4294901760
        %904 = vmatpush1.msra.mxu0 %v903
        %905 = vmatprep.subr.mxu0 0.0
        %v906 = vand.u32 %v857, 4294901760
        %907 = vmatpush1.msra.mxu0 %v906
        %908 = vmatprep.subr.mxu0 0.0
        %v909 = vand.u32 %v858, 4294901760
        %910 = vmatpush1.msra.mxu0 %v909
        %911 = vmatprep.subr.mxu0 0.0
        %v912 = vand.u32 %v859, 4294901760
        %913 = vmatpush1.msra.mxu0 %v912
        %914 = vmatprep.subr.mxu0 0.0
        %v915 = vand.u32 %v860, 4294901760
        %916 = vmatpush1.msra.mxu0 %v915
        %917 = vmatprep.subr.mxu0 0.0
        %v918 = vand.u32 %v861, 4294901760
        %919 = vmatpush1.msra.mxu0 %v918
        %920 = vmatprep.subr.mxu0 0.0
        %v921 = vand.u32 %v862, 4294901760
        %922 = vmatpush1.msra.mxu0 %v921
        %923 = vmatprep.subr.mxu0 0.0
        %v924 = vand.u32 %v863, 4294901760
        %925 = vmatpush1.msra.mxu0 %v924
        %926 = vmatprep.subr.mxu0 0.0
        %v927 = vand.u32 %v864, 4294901760
        %928 = vmatpush1.msra.mxu0 %v927
        %929 = vmatprep.subr.mxu0 0.0
        %v930 = vand.u32 %v865, 4294901760
        %931 = vmatpush1.msra.mxu0 %v930
        %932 = vmatprep.subr.mxu0 0.0
        %v933 = vand.u32 %v866, 4294901760
        %934 = vmatpush1.msra.mxu0 %v933
        %935 = vmatprep.subr.mxu0 0.0
        %v936 = vand.u32 %v867, 4294901760
        %937 = vmatpush1.msra.mxu0 %v936
        %938 = vmatprep.subr.mxu0 0.0
        %v939 = vand.u32 %v868, 4294901760
        %940 = vmatpush1.msra.mxu0 %v939
        %941 = vmatprep.subr.mxu0 0.0
        %v942 = vand.u32 %v869, 4294901760
        %943 = vmatpush1.msra.mxu0 %v942
        %944 = vmatprep.subr.mxu0 0.0
        %v945 = vand.u32 %v870, 4294901760
        %946 = vmatpush1.msra.mxu0 %v945
        %947 = vmatprep.subr.mxu0 0.0
        %v948 = vand.u32 %v871, 4294901760
        %949 = vmatpush1.msra.mxu0 %v948
        %950 = vmatprep.subr.mxu0 0.0
        %951 = vmatpush1.msra.mxu0 0.0
        %952 = vmatprep.subr.mxu0 0.0
        %953 = vmatpush1.msra.mxu0 0.0
        %954 = vmatprep.subr.mxu0 0.0
        %955 = vmatpush1.msra.mxu0 0.0
        %956 = vmatprep.subr.mxu0 0.0
        %957 = vmatpush1.msra.mxu0 0.0
        %958 = vmatprep.subr.mxu0 0.0
        %959 = vmatpush1.msra.mxu0 0.0
        %960 = vmatprep.subr.mxu0 0.0
        %961 = vmatpush1.msra.mxu0 0.0
        %962 = vmatprep.subr.mxu0 0.0
        %963 = vmatpush1.msra.mxu0 0.0
        %964 = vmatprep.subr.mxu0 0.0
        %965 = vmatpush1.msra.mxu0 0.0
        %966 = vmatprep.subr.mxu0 0.0
        %967 = vmatpush1.msra.mxu0 0.0
        %968 = vmatprep.subr.mxu0 0.0
        %969 = vmatpush1.msra.mxu0 0.0
        %970 = vmatprep.subr.mxu0 0.0
        %971 = vmatpush1.msra.mxu0 0.0
        %972 = vmatprep.subr.mxu0 0.0
        %973 = vmatpush1.msra.mxu0 0.0
        %974 = vmatprep.subr.mxu0 0.0
        %975 = vmatpush1.msra.mxu0 0.0
        %976 = vmatprep.subr.mxu0 0.0
        %977 = vmatpush1.msra.mxu0 0.0
        %978 = vmatprep.subr.mxu0 0.0
        %979 = vmatpush1.msra.mxu0 0.0
        %980 = vmatprep.subr.mxu0 0.0
        %981 = vmatpush1.msra.mxu0 0.0
        %982 = vmatprep.mubr.f32.mxu0 0.0
        %v983 = vand.u32 %v900, 4294901760
        %v984 = vsub.f32 %v900, %v983
        %v985 = vand.u32 %v984, 4294901760
        %v986 = vsub.f32 %v984, %v985
        %v987 = vand.u32 %v986, 4294901760
        %988 = vmatmul.mubr.f32.gmra.mrb[0].mxu0 %v987
        %v989 = vpop.f32.mrb[0].mxu0
        %v990 = vadd.f32 %v877, %v989
        %v991 = vpop.f32.mrb[0].mxu0
        %992 = vdwg.mxu0
        %993 = vmatprep.subr.mxu0 0.0
        %v994 = vand.u32 %v856, 4294901760
        %v995 = vsub.f32 %v856, %v994
        %v996 = vand.u32 %v995, 4294901760
        %v997 = vsub.f32 %v995, %v996
        %v998 = vand.u32 %v997, 4294901760
        %999 = vmatpush1.msra.mxu0 %v998
        %1000 = vmatprep.subr.mxu0 0.0
        %v1001 = vand.u32 %v857, 4294901760
        %v1002 = vsub.f32 %v857, %v1001
        %v1003 = vand.u32 %v1002, 4294901760
        %v1004 = vsub.f32 %v1002, %v1003
        %v1005 = vand.u32 %v1004, 4294901760
        %1006 = vmatpush1.msra.mxu0 %v1005
        %1007 = vmatprep.subr.mxu0 0.0
        %v1008 = vand.u32 %v858, 4294901760
        %v1009 = vsub.f32 %v858, %v1008
        %v1010 = vand.u32 %v1009, 4294901760
        %v1011 = vsub.f32 %v1009, %v1010
        %v1012 = vand.u32 %v1011, 4294901760
        %1013 = vmatpush1.msra.mxu0 %v1012
        %1014 = vmatprep.subr.mxu0 0.0
        %v1015 = vand.u32 %v859, 4294901760
        %v1016 = vsub.f32 %v859, %v1015
        %v1017 = vand.u32 %v1016, 4294901760
        %v1018 = vsub.f32 %v1016, %v1017
        %v1019 = vand.u32 %v1018, 4294901760
        %1020 = vmatpush1.msra.mxu0 %v1019
        %1021 = vmatprep.subr.mxu0 0.0
        %v1022 = vand.u32 %v860, 4294901760
        %v1023 = vsub.f32 %v860, %v1022
        %v1024 = vand.u32 %v1023, 4294901760
        %v1025 = vsub.f32 %v1023, %v1024
        %v1026 = vand.u32 %v1025, 4294901760
        %1027 = vmatpush1.msra.mxu0 %v1026
        %1028 = vmatprep.subr.mxu0 0.0
        %v1029 = vand.u32 %v861, 4294901760
        %v1030 = vsub.f32 %v861, %v1029
        %v1031 = vand.u32 %v1030, 4294901760
        %v1032 = vsub.f32 %v1030, %v1031
        %v1033 = vand.u32 %v1032, 4294901760
        %1034 = vmatpush1.msra.mxu0 %v1033
        %1035 = vmatprep.subr.mxu0 0.0
        %v1036 = vand.u32 %v862, 4294901760
        %v1037 = vsub.f32 %v862, %v1036
        %v1038 = vand.u32 %v1037, 4294901760
        %v1039 = vsub.f32 %v1037, %v1038
        %v1040 = vand.u32 %v1039, 4294901760
        %1041 = vmatpush1.msra.mxu0 %v1040
        %1042 = vmatprep.subr.mxu0 0.0
        %v1043 = vand.u32 %v863, 4294901760
        %v1044 = vsub.f32 %v863, %v1043
        %v1045 = vand.u32 %v1044, 4294901760
        %v1046 = vsub.f32 %v1044, %v1045
        %v1047 = vand.u32 %v1046, 4294901760
        %1048 = vmatpush1.msra.mxu0 %v1047
        %1049 = vmatprep.subr.mxu0 0.0
        %v1050 = vand.u32 %v864, 4294901760
        %v1051 = vsub.f32 %v864, %v1050
        %v1052 = vand.u32 %v1051, 4294901760
        %v1053 = vsub.f32 %v1051, %v1052
        %v1054 = vand.u32 %v1053, 4294901760
        %1055 = vmatpush1.msra.mxu0 %v1054
        %1056 = vmatprep.subr.mxu0 0.0
        %v1057 = vand.u32 %v865, 4294901760
        %v1058 = vsub.f32 %v865, %v1057
        %v1059 = vand.u32 %v1058, 4294901760
        %v1060 = vsub.f32 %v1058, %v1059
        %v1061 = vand.u32 %v1060, 4294901760
        %1062 = vmatpush1.msra.mxu0 %v1061
        %1063 = vmatprep.subr.mxu0 0.0
        %v1064 = vand.u32 %v866, 4294901760
        %v1065 = vsub.f32 %v866, %v1064
        %v1066 = vand.u32 %v1065, 4294901760
        %v1067 = vsub.f32 %v1065, %v1066
        %v1068 = vand.u32 %v1067, 4294901760
        %1069 = vmatpush1.msra.mxu0 %v1068
        %1070 = vmatprep.subr.mxu0 0.0
        %v1071 = vand.u32 %v867, 4294901760
        %v1072 = vsub.f32 %v867, %v1071
        %v1073 = vand.u32 %v1072, 4294901760
        %v1074 = vsub.f32 %v1072, %v1073
        %v1075 = vand.u32 %v1074, 4294901760
        %1076 = vmatpush1.msra.mxu0 %v1075
        %1077 = vmatprep.subr.mxu0 0.0
        %v1078 = vand.u32 %v868, 4294901760
        %v1079 = vsub.f32 %v868, %v1078
        %v1080 = vand.u32 %v1079, 4294901760
        %v1081 = vsub.f32 %v1079, %v1080
        %v1082 = vand.u32 %v1081, 4294901760
        %1083 = vmatpush1.msra.mxu0 %v1082
        %1084 = vmatprep.subr.mxu0 0.0
        %v1085 = vand.u32 %v869, 4294901760
        %v1086 = vsub.f32 %v869, %v1085
        %v1087 = vand.u32 %v1086, 4294901760
        %v1088 = vsub.f32 %v1086, %v1087
        %v1089 = vand.u32 %v1088, 4294901760
        %1090 = vmatpush1.msra.mxu0 %v1089
        %1091 = vmatprep.subr.mxu0 0.0
        %v1092 = vand.u32 %v870, 4294901760
        %v1093 = vsub.f32 %v870, %v1092
        %v1094 = vand.u32 %v1093, 4294901760
        %v1095 = vsub.f32 %v1093, %v1094
        %v1096 = vand.u32 %v1095, 4294901760
        %1097 = vmatpush1.msra.mxu0 %v1096
        %1098 = vmatprep.subr.mxu0 0.0
        %v1099 = vand.u32 %v871, 4294901760
        %v1100 = vsub.f32 %v871, %v1099
        %v1101 = vand.u32 %v1100, 4294901760
        %v1102 = vsub.f32 %v1100, %v1101
        %v1103 = vand.u32 %v1102, 4294901760
        %1104 = vmatpush1.msra.mxu0 %v1103
        %1105 = vmatprep.subr.mxu0 0.0
        %1106 = vmatpush1.msra.mxu0 0.0
        %1107 = vmatprep.subr.mxu0 0.0
        %1108 = vmatpush1.msra.mxu0 0.0
        %1109 = vmatprep.subr.mxu0 0.0
        %1110 = vmatpush1.msra.mxu0 0.0
        %1111 = vmatprep.subr.mxu0 0.0
        %1112 = vmatpush1.msra.mxu0 0.0
        %1113 = vmatprep.subr.mxu0 0.0
        %1114 = vmatpush1.msra.mxu0 0.0
        %1115 = vmatprep.subr.mxu0 0.0
        %1116 = vmatpush1.msra.mxu0 0.0
        %1117 = vmatprep.subr.mxu0 0.0
        %1118 = vmatpush1.msra.mxu0 0.0
        %1119 = vmatprep.subr.mxu0 0.0
        %1120 = vmatpush1.msra.mxu0 0.0
        %1121 = vmatprep.subr.mxu0 0.0
        %1122 = vmatpush1.msra.mxu0 0.0
        %1123 = vmatprep.subr.mxu0 0.0
        %1124 = vmatpush1.msra.mxu0 0.0
        %1125 = vmatprep.subr.mxu0 0.0
        %1126 = vmatpush1.msra.mxu0 0.0
        %1127 = vmatprep.subr.mxu0 0.0
        %1128 = vmatpush1.msra.mxu0 0.0
        %1129 = vmatprep.subr.mxu0 0.0
        %1130 = vmatpush1.msra.mxu0 0.0
        %1131 = vmatprep.subr.mxu0 0.0
        %1132 = vmatpush1.msra.mxu0 0.0
        %1133 = vmatprep.subr.mxu0 0.0
        %1134 = vmatpush1.msra.mxu0 0.0
        %1135 = vmatprep.subr.mxu0 0.0
        %1136 = vmatpush1.msra.mxu0 0.0
        %1137 = vmatprep.mubr.f32.mxu0 0.0
        %v1138 = vand.u32 %v900, 4294901760
        %1139 = vmatmul.mubr.f32.gmra.mrb[0].mxu0 %v1138
        %v1140 = vpop.f32.mrb[0].mxu0
        %v1141 = vadd.f32 %v990, %v1140
        %v1142 = vpop.f32.mrb[0].mxu0
        %1143 = vdwg.mxu0
        %1144 = vmatprep.subr.mxu0 0.0
        %v1145 = vand.u32 %v856, 4294901760
        %v1146 = vsub.f32 %v856, %v1145
        %1147 = vmatpush1.msra.mxu0 %v1146
        %1148 = vmatprep.subr.mxu0 0.0
        %v1149 = vand.u32 %v857, 4294901760
        %v1150 = vsub.f32 %v857, %v1149
        %1151 = vmatpush1.msra.mxu0 %v1150
        %1152 = vmatprep.subr.mxu0 0.0
        %v1153 = vand.u32 %v858, 4294901760
        %v1154 = vsub.f32 %v858, %v1153
        %1155 = vmatpush1.msra.mxu0 %v1154
        %1156 = vmatprep.subr.mxu0 0.0
        %v1157 = vand.u32 %v859, 4294901760
        %v1158 = vsub.f32 %v859, %v1157
        %1159 = vmatpush1.msra.mxu0 %v1158
        %1160 = vmatprep.subr.mxu0 0.0
        %v1161 = vand.u32 %v860, 4294901760
        %v1162 = vsub.f32 %v860, %v1161
        %1163 = vmatpush1.msra.mxu0 %v1162
        %1164 = vmatprep.subr.mxu0 0.0
        %v1165 = vand.u32 %v861, 4294901760
        %v1166 = vsub.f32 %v861, %v1165
        %1167 = vmatpush1.msra.mxu0 %v1166
        %1168 = vmatprep.subr.mxu0 0.0
        %v1169 = vand.u32 %v862, 4294901760
        %v1170 = vsub.f32 %v862, %v1169
        %1171 = vmatpush1.msra.mxu0 %v1170
        %1172 = vmatprep.subr.mxu0 0.0
        %v1173 = vand.u32 %v863, 4294901760
        %v1174 = vsub.f32 %v863, %v1173
        %1175 = vmatpush1.msra.mxu0 %v1174
        %1176 = vmatprep.subr.mxu0 0.0
        %v1177 = vand.u32 %v864, 4294901760
        %v1178 = vsub.f32 %v864, %v1177
        %1179 = vmatpush1.msra.mxu0 %v1178
        %1180 = vmatprep.subr.mxu0 0.0
        %v1181 = vand.u32 %v865, 4294901760
        %v1182 = vsub.f32 %v865, %v1181
        %1183 = vmatpush1.msra.mxu0 %v1182
        %1184 = vmatprep.subr.mxu0 0.0
        %v1185 = vand.u32 %v866, 4294901760
        %v1186 = vsub.f32 %v866, %v1185
        %1187 = vmatpush1.msra.mxu0 %v1186
        %1188 = vmatprep.subr.mxu0 0.0
        %v1189 = vand.u32 %v867, 4294901760
        %v1190 = vsub.f32 %v867, %v1189
        %1191 = vmatpush1.msra.mxu0 %v1190
        %1192 = vmatprep.subr.mxu0 0.0
        %v1193 = vand.u32 %v868, 4294901760
        %v1194 = vsub.f32 %v868, %v1193
        %1195 = vmatpush1.msra.mxu0 %v1194
        %1196 = vmatprep.subr.mxu0 0.0
        %v1197 = vand.u32 %v869, 4294901760
        %v1198 = vsub.f32 %v869, %v1197
        %1199 = vmatpush1.msra.mxu0 %v1198
        %1200 = vmatprep.subr.mxu0 0.0
        %v1201 = vand.u32 %v870, 4294901760
        %v1202 = vsub.f32 %v870, %v1201
        %1203 = vmatpush1.msra.mxu0 %v1202
        %1204 = vmatprep.subr.mxu0 0.0
        %v1205 = vand.u32 %v871, 4294901760
        %v1206 = vsub.f32 %v871, %v1205
        %1207 = vmatpush1.msra.mxu0 %v1206
        %1208 = vmatprep.subr.mxu0 0.0
        %1209 = vmatpush1.msra.mxu0 0.0
        %1210 = vmatprep.subr.mxu0 0.0
        %1211 = vmatpush1.msra.mxu0 0.0
        %1212 = vmatprep.subr.mxu0 0.0
        %1213 = vmatpush1.msra.mxu0 0.0
        %1214 = vmatprep.subr.mxu0 0.0
        %1215 = vmatpush1.msra.mxu0 0.0
        %1216 = vmatprep.subr.mxu0 0.0
        %1217 = vmatpush1.msra.mxu0 0.0
        %1218 = vmatprep.subr.mxu0 0.0
        %1219 = vmatpush1.msra.mxu0 0.0
        %1220 = vmatprep.subr.mxu0 0.0
        %1221 = vmatpush1.msra.mxu0 0.0
        %1222 = vmatprep.subr.mxu0 0.0
        %1223 = vmatpush1.msra.mxu0 0.0
        %1224 = vmatprep.subr.mxu0 0.0
        %1225 = vmatpush1.msra.mxu0 0.0
        %1226 = vmatprep.subr.mxu0 0.0
        %1227 = vmatpush1.msra.mxu0 0.0
        %1228 = vmatprep.subr.mxu0 0.0
        %1229 = vmatpush1.msra.mxu0 0.0
        %1230 = vmatprep.subr.mxu0 0.0
        %1231 = vmatpush1.msra.mxu0 0.0
        %1232 = vmatprep.subr.mxu0 0.0
        %1233 = vmatpush1.msra.mxu0 0.0
        %1234 = vmatprep.subr.mxu0 0.0
        %1235 = vmatpush1.msra.mxu0 0.0
        %1236 = vmatprep.subr.mxu0 0.0
        %1237 = vmatpush1.msra.mxu0 0.0
        %1238 = vmatprep.subr.mxu0 0.0
        %1239 = vmatpush1.msra.mxu0 0.0
        %1240 = vmatprep.mubr.f32.mxu0 0.0
        %v1241 = vand.u32 %v900, 4294901760
        %v1242 = vsub.f32 %v900, %v1241
        %1243 = vmatmul.mubr.f32.gmra.mrb[0].mxu0 %v1242
        %v1244 = vpop.f32.mrb[0].mxu0
        %v1245 = vadd.f32 %v1141, %v1244
        %v1246 = vpop.f32.mrb[0].mxu0
        %1247 = vdwg.mxu0
        %1248 = vmatprep.subr.mxu0 0.0
        %v1249 = vand.u32 %v856, 4294901760
        %1250 = vmatpush1.msra.mxu0 %v1249
        %1251 = vmatprep.subr.mxu0 0.0
        %v1252 = vand.u32 %v857, 4294901760
        %1253 = vmatpush1.msra.mxu0 %v1252
        %1254 = vmatprep.subr.mxu0 0.0
        %v1255 = vand.u32 %v858, 4294901760
        %1256 = vmatpush1.msra.mxu0 %v1255
        %1257 = vmatprep.subr.mxu0 0.0
        %v1258 = vand.u32 %v859, 4294901760
        %1259 = vmatpush1.msra.mxu0 %v1258
        %1260 = vmatprep.subr.mxu0 0.0
        %v1261 = vand.u32 %v860, 4294901760
        %1262 = vmatpush1.msra.mxu0 %v1261
        %1263 = vmatprep.subr.mxu0 0.0
        %v1264 = vand.u32 %v861, 4294901760
        %1265 = vmatpush1.msra.mxu0 %v1264
        %1266 = vmatprep.subr.mxu0 0.0
        %v1267 = vand.u32 %v862, 4294901760
        %1268 = vmatpush1.msra.mxu0 %v1267
        %1269 = vmatprep.subr.mxu0 0.0
        %v1270 = vand.u32 %v863, 4294901760
        %1271 = vmatpush1.msra.mxu0 %v1270
        %1272 = vmatprep.subr.mxu0 0.0
        %v1273 = vand.u32 %v864, 4294901760
        %1274 = vmatpush1.msra.mxu0 %v1273
        %1275 = vmatprep.subr.mxu0 0.0
        %v1276 = vand.u32 %v865, 4294901760
        %1277 = vmatpush1.msra.mxu0 %v1276
        %1278 = vmatprep.subr.mxu0 0.0
        %v1279 = vand.u32 %v866, 4294901760
        %1280 = vmatpush1.msra.mxu0 %v1279
        %1281 = vmatprep.subr.mxu0 0.0
        %v1282 = vand.u32 %v867, 4294901760
        %1283 = vmatpush1.msra.mxu0 %v1282
        %1284 = vmatprep.subr.mxu0 0.0
        %v1285 = vand.u32 %v868, 4294901760
        %1286 = vmatpush1.msra.mxu0 %v1285
        %1287 = vmatprep.subr.mxu0 0.0
        %v1288 = vand.u32 %v869, 4294901760
        %1289 = vmatpush1.msra.mxu0 %v1288
        %1290 = vmatprep.subr.mxu0 0.0
        %v1291 = vand.u32 %v870, 4294901760
        %1292 = vmatpush1.msra.mxu0 %v1291
        %1293 = vmatprep.subr.mxu0 0.0
        %v1294 = vand.u32 %v871, 4294901760
        %1295 = vmatpush1.msra.mxu0 %v1294
        %1296 = vmatprep.subr.mxu0 0.0
        %1297 = vmatpush1.msra.mxu0 0.0
        %1298 = vmatprep.subr.mxu0 0.0
        %1299 = vmatpush1.msra.mxu0 0.0
        %1300 = vmatprep.subr.mxu0 0.0
        %1301 = vmatpush1.msra.mxu0 0.0
        %1302 = vmatprep.subr.mxu0 0.0
        %1303 = vmatpush1.msra.mxu0 0.0
        %1304 = vmatprep.subr.mxu0 0.0
        %1305 = vmatpush1.msra.mxu0 0.0
        %1306 = vmatprep.subr.mxu0 0.0
        %1307 = vmatpush1.msra.mxu0 0.0
        %1308 = vmatprep.subr.mxu0 0.0
        %1309 = vmatpush1.msra.mxu0 0.0
        %1310 = vmatprep.subr.mxu0 0.0
        %1311 = vmatpush1.msra.mxu0 0.0
        %1312 = vmatprep.subr.mxu0 0.0
        %1313 = vmatpush1.msra.mxu0 0.0
        %1314 = vmatprep.subr.mxu0 0.0
        %1315 = vmatpush1.msra.mxu0 0.0
        %1316 = vmatprep.subr.mxu0 0.0
        %1317 = vmatpush1.msra.mxu0 0.0
        %1318 = vmatprep.subr.mxu0 0.0
        %1319 = vmatpush1.msra.mxu0 0.0
        %1320 = vmatprep.subr.mxu0 0.0
        %1321 = vmatpush1.msra.mxu0 0.0
        %1322 = vmatprep.subr.mxu0 0.0
        %1323 = vmatpush1.msra.mxu0 0.0
        %1324 = vmatprep.subr.mxu0 0.0
        %1325 = vmatpush1.msra.mxu0 0.0
        %1326 = vmatprep.subr.mxu0 0.0
        %1327 = vmatpush1.msra.mxu0 0.0
        %1328 = vmatprep.mubr.f32.mxu0 0.0
        %v1329 = vand.u32 %v900, 4294901760
        %v1330 = vsub.f32 %v900, %v1329
        %v1331 = vand.u32 %v1330, 4294901760
        %1332 = vmatmul.mubr.f32.gmra.mrb[0].mxu0 %v1331
        %v1333 = vpop.f32.mrb[0].mxu0
        %v1334 = vadd.f32 %v1245, %v1333
        %v1335 = vpop.f32.mrb[0].mxu0
        %1336 = vdwg.mxu0
        %1337 = vmatprep.subr.mxu0 0.0
        %v1338 = vand.u32 %v856, 4294901760
        %v1339 = vsub.f32 %v856, %v1338
        %v1340 = vand.u32 %v1339, 4294901760
        %1341 = vmatpush1.msra.mxu0 %v1340
        %1342 = vmatprep.subr.mxu0 0.0
        %v1343 = vand.u32 %v857, 4294901760
        %v1344 = vsub.f32 %v857, %v1343
        %v1345 = vand.u32 %v1344, 4294901760
        %1346 = vmatpush1.msra.mxu0 %v1345
        %1347 = vmatprep.subr.mxu0 0.0
        %v1348 = vand.u32 %v858, 4294901760
        %v1349 = vsub.f32 %v858, %v1348
        %v1350 = vand.u32 %v1349, 4294901760
        %1351 = vmatpush1.msra.mxu0 %v1350
        %1352 = vmatprep.subr.mxu0 0.0
        %v1353 = vand.u32 %v859, 4294901760
        %v1354 = vsub.f32 %v859, %v1353
        %v1355 = vand.u32 %v1354, 4294901760
        %1356 = vmatpush1.msra.mxu0 %v1355
        %1357 = vmatprep.subr.mxu0 0.0
        %v1358 = vand.u32 %v860, 4294901760
        %v1359 = vsub.f32 %v860, %v1358
        %v1360 = vand.u32 %v1359, 4294901760
        %1361 = vmatpush1.msra.mxu0 %v1360
        %1362 = vmatprep.subr.mxu0 0.0
        %v1363 = vand.u32 %v861, 4294901760
        %v1364 = vsub.f32 %v861, %v1363
        %v1365 = vand.u32 %v1364, 4294901760
        %1366 = vmatpush1.msra.mxu0 %v1365
        %1367 = vmatprep.subr.mxu0 0.0
        %v1368 = vand.u32 %v862, 4294901760
        %v1369 = vsub.f32 %v862, %v1368
        %v1370 = vand.u32 %v1369, 4294901760
        %1371 = vmatpush1.msra.mxu0 %v1370
        %1372 = vmatprep.subr.mxu0 0.0
        %v1373 = vand.u32 %v863, 4294901760
        %v1374 = vsub.f32 %v863, %v1373
        %v1375 = vand.u32 %v1374, 4294901760
        %1376 = vmatpush1.msra.mxu0 %v1375
        %1377 = vmatprep.subr.mxu0 0.0
        %v1378 = vand.u32 %v864, 4294901760
        %v1379 = vsub.f32 %v864, %v1378
        %v1380 = vand.u32 %v1379, 4294901760
        %1381 = vmatpush1.msra.mxu0 %v1380
        %1382 = vmatprep.subr.mxu0 0.0
        %v1383 = vand.u32 %v865, 4294901760
        %v1384 = vsub.f32 %v865, %v1383
        %v1385 = vand.u32 %v1384, 4294901760
        %1386 = vmatpush1.msra.mxu0 %v1385
        %1387 = vmatprep.subr.mxu0 0.0
        %v1388 = vand.u32 %v866, 4294901760
        %v1389 = vsub.f32 %v866, %v1388
        %v1390 = vand.u32 %v1389, 4294901760
        %1391 = vmatpush1.msra.mxu0 %v1390
        %1392 = vmatprep.subr.mxu0 0.0
        %v1393 = vand.u32 %v867, 4294901760
        %v1394 = vsub.f32 %v867, %v1393
        %v1395 = vand.u32 %v1394, 4294901760
        %1396 = vmatpush1.msra.mxu0 %v1395
        %1397 = vmatprep.subr.mxu0 0.0
        %v1398 = vand.u32 %v868, 4294901760
        %v1399 = vsub.f32 %v868, %v1398
        %v1400 = vand.u32 %v1399, 4294901760
        %1401 = vmatpush1.msra.mxu0 %v1400
        %1402 = vmatprep.subr.mxu0 0.0
        %v1403 = vand.u32 %v869, 4294901760
        %v1404 = vsub.f32 %v869, %v1403
        %v1405 = vand.u32 %v1404, 4294901760
        %1406 = vmatpush1.msra.mxu0 %v1405
        %1407 = vmatprep.subr.mxu0 0.0
        %v1408 = vand.u32 %v870, 4294901760
        %v1409 = vsub.f32 %v870, %v1408
        %v1410 = vand.u32 %v1409, 4294901760
        %1411 = vmatpush1.msra.mxu0 %v1410
        %1412 = vmatprep.subr.mxu0 0.0
        %v1413 = vand.u32 %v871, 4294901760
        %v1414 = vsub.f32 %v871, %v1413
        %v1415 = vand.u32 %v1414, 4294901760
        %1416 = vmatpush1.msra.mxu0 %v1415
        %1417 = vmatprep.subr.mxu0 0.0
        %1418 = vmatpush1.msra.mxu0 0.0
        %1419 = vmatprep.subr.mxu0 0.0
        %1420 = vmatpush1.msra.mxu0 0.0
        %1421 = vmatprep.subr.mxu0 0.0
        %1422 = vmatpush1.msra.mxu0 0.0
        %1423 = vmatprep.subr.mxu0 0.0
        %1424 = vmatpush1.msra.mxu0 0.0
        %1425 = vmatprep.subr.mxu0 0.0
        %1426 = vmatpush1.msra.mxu0 0.0
        %1427 = vmatprep.subr.mxu0 0.0
        %1428 = vmatpush1.msra.mxu0 0.0
        %1429 = vmatprep.subr.mxu0 0.0
        %1430 = vmatpush1.msra.mxu0 0.0
        %1431 = vmatprep.subr.mxu0 0.0
        %1432 = vmatpush1.msra.mxu0 0.0
        %1433 = vmatprep.subr.mxu0 0.0
        %1434 = vmatpush1.msra.mxu0 0.0
        %1435 = vmatprep.subr.mxu0 0.0
        %1436 = vmatpush1.msra.mxu0 0.0
        %1437 = vmatprep.subr.mxu0 0.0
        %1438 = vmatpush1.msra.mxu0 0.0
        %1439 = vmatprep.subr.mxu0 0.0
        %1440 = vmatpush1.msra.mxu0 0.0
        %1441 = vmatprep.subr.mxu0 0.0
        %1442 = vmatpush1.msra.mxu0 0.0
        %1443 = vmatprep.subr.mxu0 0.0
        %1444 = vmatpush1.msra.mxu0 0.0
        %1445 = vmatprep.subr.mxu0 0.0
        %1446 = vmatpush1.msra.mxu0 0.0
        %1447 = vmatprep.subr.mxu0 0.0
        %1448 = vmatpush1.msra.mxu0 0.0
        %1449 = vmatprep.mubr.f32.mxu0 0.0
        %v1450 = vand.u32 %v900, 4294901760
        %1451 = vmatmul.mubr.f32.gmra.mrb[0].mxu0 %v1450
        %v1452 = vpop.f32.mrb[0].mxu0
        %v1453 = vadd.f32 %v1334, %v1452
        %v1454 = vpop.f32.mrb[0].mxu0
        %1455 = vdwg.mxu0
        %1456 = vmatprep.subr.mxu0 0.0
        %v1457 = vand.u32 %v856, 4294901760
        %1458 = vmatpush1.msra.mxu0 %v1457
        %1459 = vmatprep.subr.mxu0 0.0
        %v1460 = vand.u32 %v857, 4294901760
        %1461 = vmatpush1.msra.mxu0 %v1460
        %1462 = vmatprep.subr.mxu0 0.0
        %v1463 = vand.u32 %v858, 4294901760
        %1464 = vmatpush1.msra.mxu0 %v1463
        %1465 = vmatprep.subr.mxu0 0.0
        %v1466 = vand.u32 %v859, 4294901760
        %1467 = vmatpush1.msra.mxu0 %v1466
        %1468 = vmatprep.subr.mxu0 0.0
        %v1469 = vand.u32 %v860, 4294901760
        %1470 = vmatpush1.msra.mxu0 %v1469
        %1471 = vmatprep.subr.mxu0 0.0
        %v1472 = vand.u32 %v861, 4294901760
        %1473 = vmatpush1.msra.mxu0 %v1472
        %1474 = vmatprep.subr.mxu0 0.0
        %v1475 = vand.u32 %v862, 4294901760
        %1476 = vmatpush1.msra.mxu0 %v1475
        %1477 = vmatprep.subr.mxu0 0.0
        %v1478 = vand.u32 %v863, 4294901760
        %1479 = vmatpush1.msra.mxu0 %v1478
        %1480 = vmatprep.subr.mxu0 0.0
        %v1481 = vand.u32 %v864, 4294901760
        %1482 = vmatpush1.msra.mxu0 %v1481
        %1483 = vmatprep.subr.mxu0 0.0
        %v1484 = vand.u32 %v865, 4294901760
        %1485 = vmatpush1.msra.mxu0 %v1484
        %1486 = vmatprep.subr.mxu0 0.0
        %v1487 = vand.u32 %v866, 4294901760
        %1488 = vmatpush1.msra.mxu0 %v1487
        %1489 = vmatprep.subr.mxu0 0.0
        %v1490 = vand.u32 %v867, 4294901760
        %1491 = vmatpush1.msra.mxu0 %v1490
        %1492 = vmatprep.subr.mxu0 0.0
        %v1493 = vand.u32 %v868, 4294901760
        %1494 = vmatpush1.msra.mxu0 %v1493
        %1495 = vmatprep.subr.mxu0 0.0
        %v1496 = vand.u32 %v869, 4294901760
        %1497 = vmatpush1.msra.mxu0 %v1496
        %1498 = vmatprep.subr.mxu0 0.0
        %v1499 = vand.u32 %v870, 4294901760
        %1500 = vmatpush1.msra.mxu0 %v1499
        %1501 = vmatprep.subr.mxu0 0.0
        %v1502 = vand.u32 %v871, 4294901760
        %1503 = vmatpush1.msra.mxu0 %v1502
        %1504 = vmatprep.subr.mxu0 0.0
        %1505 = vmatpush1.msra.mxu0 0.0
        %1506 = vmatprep.subr.mxu0 0.0
        %1507 = vmatpush1.msra.mxu0 0.0
        %1508 = vmatprep.subr.mxu0 0.0
        %1509 = vmatpush1.msra.mxu0 0.0
        %1510 = vmatprep.subr.mxu0 0.0
        %1511 = vmatpush1.msra.mxu0 0.0
        %1512 = vmatprep.subr.mxu0 0.0
        %1513 = vmatpush1.msra.mxu0 0.0
        %1514 = vmatprep.subr.mxu0 0.0
        %1515 = vmatpush1.msra.mxu0 0.0
        %1516 = vmatprep.subr.mxu0 0.0
        %1517 = vmatpush1.msra.mxu0 0.0
        %1518 = vmatprep.subr.mxu0 0.0
        %1519 = vmatpush1.msra.mxu0 0.0
        %1520 = vmatprep.subr.mxu0 0.0
        %1521 = vmatpush1.msra.mxu0 0.0
        %1522 = vmatprep.subr.mxu0 0.0
        %1523 = vmatpush1.msra.mxu0 0.0
        %1524 = vmatprep.subr.mxu0 0.0
        %1525 = vmatpush1.msra.mxu0 0.0
        %1526 = vmatprep.subr.mxu0 0.0
        %1527 = vmatpush1.msra.mxu0 0.0
        %1528 = vmatprep.subr.mxu0 0.0
        %1529 = vmatpush1.msra.mxu0 0.0
        %1530 = vmatprep.subr.mxu0 0.0
        %1531 = vmatpush1.msra.mxu0 0.0
        %1532 = vmatprep.subr.mxu0 0.0
        %1533 = vmatpush1.msra.mxu0 0.0
        %1534 = vmatprep.subr.mxu0 0.0
        %1535 = vmatpush1.msra.mxu0 0.0
        %1536 = vmatprep.mubr.f32.mxu0 0.0
        %v1537 = vand.u32 %v900, 4294901760
        %1538 = vmatmul.mubr.f32.gmra.mrb[0].mxu0 %v1537
        %v1539 = vpop.f32.mrb[0].mxu0
        %v1540 = vadd.f32 %v1453, %v1539
        %v1541 = vpop.f32.mrb[0].mxu0
        %1542 = vdwg.mxu0
        %1543 = vst [vmem:[%s303] sm:$0xff] %v900
        %1544 = vst [vmem:[%s310] sm:$0xff] %v1540
        %s1545 = sand.u32 %s151, 1
        %s1546 = scalar_lea.sflag [#allocation4], %s1545
        %s1547 = sand.u32 %s151, 1
        %s1548 = smul.addr %s1547, 8
        %s1549 = scalar_lea.vmem [#allocation7], %s1548
        %s1550 = sand.u32 %s177, 1
        %s1551 = scalar_lea.sflag [#allocation9], %s1550
        %s1552 = sand.u32 %s177, 1
        %s1553 = smul.addr %s1552, 8
        %s1554 = scalar_lea.vmem [#allocation8], %s1553
        // Predicated region
        $region49: #{tpu_custom_call.1} parent=39 // pred_check
          %p1555 = pneg %p161
        $region50: #{tpu_custom_call.1} parent=39 // pred_check_branch
          %1557 = sbr.rel (%p1555) target = $region52
        $region51: #{tpu_custom_call.1} parent=39 // pred_region
          %s1559 = ssub.s32 128, 128
          %1560 = vsyncadd %s1546, %s1559
          %s1561 = smul.addr %s28, 128
          %s1562 = scalar_lea.hbm %s5, %s1561
          %s1564 = sshll.u32 %s1549, 4
          %s1565 = int_to_ptr.vmem [resolvable:$true] %s1564
          %1567 = dma.vmem_to_hbm [thread:$0]  %s1565, 128, %s1562, %s1546
        $region52: #{tpu_custom_call.1} parent=39 // pred_fallthru
          _
        // Predicated region
        $region53: #{tpu_custom_call.1} parent=39 // pred_check
          %p1568 = pneg %p187
        $region54: #{tpu_custom_call.1} parent=39 // pred_check_branch
          %1570 = sbr.rel (%p1568) target = $region56
        $region55: #{tpu_custom_call.1} parent=39 // pred_region
          %s1572 = ssub.s32 128, 128
          %1573 = vsyncadd %s1551, %s1572
          %s1574 = smul.addr %s28, 128
          %s1575 = scalar_lea.hbm %s6, %s1574
          %s1577 = sshll.u32 %s1554, 4
          %s1578 = int_to_ptr.vmem [resolvable:$true] %s1577
          %1580 = dma.vmem_to_hbm [thread:$0]  %s1578, 128, %s1575, %s1551
        $region56: #{tpu_custom_call.1} parent=39 // pred_fallthru
          _
      $region40: #{tpu_custom_call.1} parent=5 // pred_fallthru
        _
      %p1581 = scmp.le.s32.totalorder 2, %s23
      // Predicated region
      $region57: #{tpu_custom_call.1} parent=5 // pred_check
        %p1582 = pneg %p1581
      $region58: #{tpu_custom_call.1} parent=5 // pred_check_branch
        %1584 = sbr.rel (%p1582) target = $region60
      $region59: #{tpu_custom_call.1} parent=5 // pred_region
        %s1585 = ssub.s32 %s23, 2
        // Predicated region
        $region61: #{tpu_custom_call.1} parent=59 // pred_check
          %p1586 = pneg %p167
        $region62: #{tpu_custom_call.1} parent=59 // pred_check_branch
          %1588 = sbr.rel (%p1586) target = $region64
        $region63: #{tpu_custom_call.1} parent=59 // pred_region
          %s1589 = sand.u32 %s152, 1
          %s1590 = scalar_lea.sflag [#allocation4], %s1589
          %s1591 = sand.u32 %s152, 1
          %s1592 = smul.addr %s1591, 8
          %s1593 = scalar_lea.vmem [#allocation7], %s1592
          %1594 = dma.done %s1590, 128
        $region64: #{tpu_custom_call.1} parent=59 // pred_fallthru
          _
        // Predicated region
        $region65: #{tpu_custom_call.1} parent=59 // pred_check
          %p1595 = pneg %p193
        $region66: #{tpu_custom_call.1} parent=59 // pred_check_branch
          %1597 = sbr.rel (%p1595) target = $region68
        $region67: #{tpu_custom_call.1} parent=59 // pred_region
          %s1598 = sand.u32 %s178, 1
          %s1599 = scalar_lea.sflag [#allocation9], %s1598
          %s1600 = sand.u32 %s178, 1
          %s1601 = smul.addr %s1600, 8
          %s1602 = scalar_lea.vmem [#allocation8], %s1601
          %1603 = dma.done %s1599, 128
        $region68: #{tpu_custom_call.1} parent=59 // pred_fallthru
          _
      $region60: #{tpu_custom_call.1} parent=5 // pred_fallthru
        _
    $region6: #{tpu_custom_call.1} parent=1 // loop_footer
      %s27 = sadd.s32 1, %s23
    $region7: #{tpu_custom_call.1} parent=1 // loop_footer_branch
      %22 = sbr.rel target = $region3
    $region8: #{tpu_custom_call.1} parent=1 // loop_exit
      _
    %1604 = vsyncpa [#allocation3], 1
    %s1605 = scalar_lea.sflag [#allocation3], 1
    %1606 = vsyncpa %s1605, 1
    %1607 = vsyncpa [#allocation6], 1
    %1608 = vsyncpa [#allocation4], 1
    %s1609 = scalar_lea.sflag [#allocation4], 1
    %1610 = vsyncpa %s1609, 1
    %1611 = vsyncpa [#allocation9], 1
    %s1612 = scalar_lea.sflag [#allocation9], 1
    %1613 = vsyncpa %s1612, 1

</llo_original>
